<compile_context>
chip_gen: v7x
topology: tpu7x:2x2x1
jax: 0.10.0
libtpu: 0.0.40
codegen_flags: <defaults>
</compile_context>

<pallas_src>
import jax
import jax.numpy as jnp
from jax.experimental import pallas as pl
from jax.experimental.pallas import tpu as pltpu

LATENT = 128   # latent_dim in the module
HID2 = 64      # second hidden of mlp_deform
V = 64         # number of template sphere vertices (small stand-in for ico_sphere(4))


def _round_up(x, m):
    return ((x + m - 1) // m) * m


def _shape_decoder_kernel(sr_ref,            # SMEM (1,)  start_render scalar
                          feat_ref,          # (TM, 128)  per-object latents (block)
                          vertsp_ref,        # (V, 128)   template verts, lanes 3.. zero
                          w1_ref, b1_ref,    # mlp_shape layer 1: (128,128),(1,128)
                          w2_ref, b2_ref,    # mlp_shape layer 2: (128,128),(1,128)
                          d1f_ref, d1xp_ref, bd1_ref,  # deform l1 split: (128,128),(128,128),(1,128)
                          d2_ref, bd2_ref,   # deform l2: (128,64),(1,64)
                          d3p_ref, bd3p_ref, # deform l3 zero-padded: (64,128),(1,128)
                          out_ref):          # (TM*V, 128) lane-dense output slab block
    tm = feat_ref.shape[0]
    v = vertsp_ref.shape[0]
    lat = feat_ref.shape[1]

    feat = feat_ref[...]                                                     # (TM,128)

    # ---- mlp_shape: Linear -> ReLU -> Linear ------------------------------
    h = jnp.dot(feat, w1_ref[...], preferred_element_type=jnp.float32) + b1_ref[...]
    h = jnp.maximum(h, 0.0)
    feat2 = jnp.dot(h, w2_ref[...], preferred_element_type=jnp.float32) + b2_ref[...]  # (TM,128)

    vertsp = vertsp_ref[...]                                                 # (V,128), lanes 3.. zero

    # ---- mlp_deform on cat([feat2 expanded over V, verts], -1) ------------
    # cat + Linear(131,128)  ==  feat2 @ W_feat (per object)  +  verts @ W_xyz + b (object-invariant)
    feat_c = jnp.dot(feat2, d1f_ref[...], preferred_element_type=jnp.float32)              # (TM,128)
    vert_c = (jnp.dot(vertsp, d1xp_ref[...], preferred_element_type=jnp.float32)
              + bd1_ref[...])                                                              # (V,128)

    z = jnp.maximum(feat_c[:, None, :] + vert_c[None, :, :], 0.0).reshape(tm * v, lat)     # (TM*V,128)
    z = jnp.maximum(jnp.dot(z, d2_ref[...], preferred_element_type=jnp.float32)
                    + bd2_ref[...], 0.0)                                                   # (TM*V,64)
    offp = jnp.dot(z, d3p_ref[...], preferred_element_type=jnp.float32) + bd3p_ref[...]    # (TM*V,128)

    verts_full = jnp.tile(vertsp, (tm, 1))                                                 # (TM*V,128)
    out_ref[...] = verts_full + offp * sr_ref[0]


@jax.jit
def shape_decoder_forward(shape_feat, start_render, verts, params):
    """shape_feat: [B, O, 128]; start_render: scalar; verts: [V, 3].

    Returns deformed vertices [B*O, V, 3] (== verts_padded() of the offset mesh).
    """
    n_batch, n_object, feat_dim = shape_feat.shape
    bo = n_batch * n_object
    v = verts.shape[0]

    # TM objects per grid block (multiple of 8 so the (TM,128) block is legal).
    tm = min(64, _round_up(bo, 8))
    bo_pad = _round_up(bo, tm)

    flat_feat = shape_feat.reshape(bo, feat_dim).astype(jnp.float32)
    flat_feat = jnp.pad(flat_feat, ((0, bo_pad - bo), (0, 0)))
    sr = jnp.asarray(start_render, jnp.float32).reshape(1)

    (w1, b1, w2, b2, d1f, d1x, bd1, d2, bd2, d3, bd3) = params

    # Zero-pad the narrow (3-wide) pieces to 128 lanes so all MXU/VPU/store paths
    # are full-width; the padded lanes stay exactly zero end-to-end.
    vertsp = jnp.pad(verts.astype(jnp.float32), ((0, 0), (0, LATENT - 3)))   # (V,128)
    d1xp = jnp.pad(d1x, ((0, LATENT - 3), (0, 0)))                           # (128,128)
    d3p = jnp.pad(d3, ((0, 0), (0, LATENT - 3)))                             # (64,128)
    bd3p = jnp.pad(bd3, ((0, 0), (0, LATENT - 3)))                           # (1,128)

    full = lambda shape: pl.BlockSpec(shape, lambda i: (0,) * len(shape))

    grid_spec = pltpu.PrefetchScalarGridSpec(
        num_scalar_prefetch=0,
        grid=(bo_pad // tm,),
        in_specs=[
            pl.BlockSpec(memory_space=pltpu.MemorySpace.SMEM),     # start_render scalar
            pl.BlockSpec((tm, LATENT), lambda i: (i, 0)),          # per-block latent rows
            full((v, LATENT)),                                     # padded template verts
            full((LATENT, LATENT)), full((1, LATENT)),             # w1, b1
            full((LATENT, LATENT)), full((1, LATENT)),             # w2, b2
            full((LATENT, LATENT)), full((LATENT, LATENT)), full((1, LATENT)),  # d1f, d1xp, bd1
            full((LATENT, HID2)), full((1, HID2)),                 # d2, bd2
            full((HID2, LATENT)), full((1, LATENT)),               # d3p, bd3p
        ],
        out_specs=pl.BlockSpec((tm * v, LATENT), lambda i: (i, 0)),
    )

    flops = 2 * bo_pad * (3 * LATENT * LATENT + v * (LATENT * HID2 + HID2 * LATENT))
    bytes_accessed = 4 * (bo_pad * LATENT + v * LATENT
                          + 4 * LATENT * LATENT + LATENT * HID2 + HID2 * LATENT
                          + bo_pad * v * LATENT)

    out_slab = pl.pallas_call(
        _shape_decoder_kernel,
        out_shape=jax.ShapeDtypeStruct((bo_pad * v, LATENT), jnp.float32),
        grid_spec=grid_spec,
        compiler_params=pltpu.CompilerParams(
            dimension_semantics=("parallel",)),
        cost_estimate=pl.CostEstimate(
            flops=flops, transcendentals=0, bytes_accessed=bytes_accessed),
    )(sr, flat_feat, vertsp, w1, b1, w2, b2, d1f, d1xp, bd1, d2, bd2, d3p, bd3p)

    # Lane-dense slab -> (B*O, V, 3): drop padded lanes / padded objects in the wrapper.
    return out_slab[: bo * v, :3].reshape(bo, v, 3)


def _reference_forward(shape_feat, start_render, verts, params):
    """Pure-JAX reference mirroring the PyTorch forward."""
    (w1, b1, w2, b2, d1f, d1x, bd1, d2, bd2, d3, bd3) = params
    B, O, F = shape_feat.shape
    x = shape_feat.reshape(B * O, F)
    x = jnp.maximum(x @ w1 + b1, 0.0)
    x = x @ w2 + b2                                            # (BO,128)
    feat = jnp.broadcast_to(x[:, None, :], (B * O, V, LATENT))
    cat_w = jnp.concatenate([d1f, d1x], axis=0)                # (131,128)
    cat_in = jnp.concatenate(
        [feat, jnp.broadcast_to(verts[None], (B * O, V, 3))], axis=-1)
    z = jnp.maximum(cat_in @ cat_w + bd1, 0.0)
    z = jnp.maximum(z @ d2 + bd2, 0.0)
    off = z @ d3 + bd3
    return verts[None] + off * start_render


def _fibonacci_sphere(n):
    """Deterministic unit-sphere vertex set (stand-in for ico_sphere(4))."""
    i = jnp.arange(n, dtype=jnp.float32) + 0.5
    phi = jnp.arccos(1.0 - 2.0 * i / n)
    theta = jnp.pi * (1.0 + 5.0 ** 0.5) * i
    x = jnp.cos(theta) * jnp.sin(phi)
    y = jnp.sin(theta) * jnp.sin(phi)
    z = jnp.cos(phi)
    return jnp.stack([x, y, z], axis=-1).astype(jnp.float32)


def _init_params(key):
    ks = jax.random.split(key, 11)
    scale = 0.05
    w1 = scale * jax.random.normal(ks[0], (LATENT, LATENT), jnp.float32)
    b1 = scale * jax.random.normal(ks[1], (1, LATENT), jnp.float32)
    w2 = scale * jax.random.normal(ks[2], (LATENT, LATENT), jnp.float32)
    b2 = scale * jax.random.normal(ks[3], (1, LATENT), jnp.float32)
    # mlp_deform first layer Linear(131,128) split into feat (128) and xyz (3) parts
    d1f = scale * jax.random.normal(ks[4], (LATENT, LATENT), jnp.float32)
    d1x = scale * jax.random.normal(ks[5], (3, LATENT), jnp.float32)
    bd1 = scale * jax.random.normal(ks[6], (1, LATENT), jnp.float32)
    d2 = scale * jax.random.normal(ks[7], (LATENT, HID2), jnp.float32)
    bd2 = scale * jax.random.normal(ks[8], (1, HID2), jnp.float32)
    d3 = scale * jax.random.normal(ks[9], (HID2, 3), jnp.float32)
    bd3 = scale * jax.random.normal(ks[10], (1, 3), jnp.float32)
    return (w1, b1, w2, b2, d1f, d1x, bd1, d2, bd2, d3, bd3)


if __name__ == "__main__":
    key = jax.random.PRNGKey(0)
    k_param, k_feat = jax.random.split(key)

    params = _init_params(k_param)
    verts = _fibonacci_sphere(V)                              # (V, 3)

    n_batch, n_object = 2, 2
    shape_feat = jax.random.normal(k_feat, (n_batch, n_object, LATENT), jnp.float32)
    start_render = 1.0

    out = shape_decoder_forward(shape_feat, start_render, verts, params)
    out = jax.block_until_ready(out)

    ref = _reference_forward(shape_feat, start_render, verts, params)
    assert out.shape == (n_batch * n_object, V, 3), out.shape
    assert jnp.allclose(out, ref, rtol=1e-3, atol=1e-3), float(jnp.max(jnp.abs(out - ref)))

    print("KERNEL_OK")
</pallas_src>

<mosaic_0001>
module attributes {stable_mosaic.version = 11 : i64} {
  func.func @_shape_decoder_kernel(%arg0: i32, %arg1: memref<1xf32, #tpu.memory_space<smem>>, %arg2: memref<8x128xf32, #tpu.memory_space<vmem>>, %arg3: memref<64x128xf32, #tpu.memory_space<vmem>>, %arg4: memref<128x128xf32, #tpu.memory_space<vmem>>, %arg5: memref<1x128xf32, #tpu.memory_space<vmem>>, %arg6: memref<128x128xf32, #tpu.memory_space<vmem>>, %arg7: memref<1x128xf32, #tpu.memory_space<vmem>>, %arg8: memref<128x128xf32, #tpu.memory_space<vmem>>, %arg9: memref<128x128xf32, #tpu.memory_space<vmem>>, %arg10: memref<1x128xf32, #tpu.memory_space<vmem>>, %arg11: memref<128x64xf32, #tpu.memory_space<vmem>>, %arg12: memref<1x64xf32, #tpu.memory_space<vmem>>, %arg13: memref<64x128xf32, #tpu.memory_space<vmem>>, %arg14: memref<1x128xf32, #tpu.memory_space<vmem>>, %arg15: memref<512x128xf32, #tpu.memory_space<vmem>>) attributes {dimension_semantics = [#tpu.dimension_semantics<parallel>], iteration_bounds = array<i64: 1>, scalar_prefetch = 0 : i64, scratch_operands = 0 : i64, tpu.core_type = #tpu.core_type<tc>, window_params = [{transform_indices = @transform_0, window_bounds = array<i64: 1>}, {transform_indices = @transform_1, window_bounds = array<i64: 8, 128>}, {pipeline_mode = #tpu.pipeline_mode<synchronous>, transform_indices = @transform_2, window_bounds = array<i64: 64, 128>}, {pipeline_mode = #tpu.pipeline_mode<synchronous>, transform_indices = @transform_3, window_bounds = array<i64: 128, 128>}, {pipeline_mode = #tpu.pipeline_mode<synchronous>, transform_indices = @transform_4, window_bounds = array<i64: 1, 128>}, {pipeline_mode = #tpu.pipeline_mode<synchronous>, transform_indices = @transform_5, window_bounds = array<i64: 128, 128>}, {pipeline_mode = #tpu.pipeline_mode<synchronous>, transform_indices = @transform_6, window_bounds = array<i64: 1, 128>}, {pipeline_mode = #tpu.pipeline_mode<synchronous>, transform_indices = @transform_7, window_bounds = array<i64: 128, 128>}, {pipeline_mode = #tpu.pipeline_mode<synchronous>, transform_indices = @transform_8, window_bounds = array<i64: 128, 128>}, {pipeline_mode = #tpu.pipeline_mode<synchronous>, transform_indices = @transform_9, window_bounds = array<i64: 1, 128>}, {pipeline_mode = #tpu.pipeline_mode<synchronous>, transform_indices = @transform_10, window_bounds = array<i64: 128, 64>}, {pipeline_mode = #tpu.pipeline_mode<synchronous>, transform_indices = @transform_11, window_bounds = array<i64: 1, 64>}, {pipeline_mode = #tpu.pipeline_mode<synchronous>, transform_indices = @transform_12, window_bounds = array<i64: 64, 128>}, {pipeline_mode = #tpu.pipeline_mode<synchronous>, transform_indices = @transform_13, window_bounds = array<i64: 1, 128>}, {transform_indices = @transform_14, window_bounds = array<i64: 512, 128>}]} {
    %c0 = arith.constant 0 : index
    %c0_0 = arith.constant 0 : index
    %0 = vector.load %arg2[%c0, %c0_0] : memref<8x128xf32, #tpu.memory_space<vmem>>, vector<8x128xf32>
    %c0_1 = arith.constant 0 : index
    %c0_2 = arith.constant 0 : index
    %1 = vector.load %arg4[%c0_1, %c0_2] : memref<128x128xf32, #tpu.memory_space<vmem>>, vector<128x128xf32>
    %cst = arith.constant dense<0.000000e+00> : vector<8x128xf32>
    %2 = tpu.matmul %0, %1, %cst {dimension_numbers = #tpu.dot_dimension_numbers<[1], [0], [0], [1], [0, 0, 1, 1], [], []>} : vector<8x128xf32>, vector<128x128xf32>, vector<8x128xf32> -> vector<8x128xf32>
    %c0_3 = arith.constant 0 : index
    %c0_4 = arith.constant 0 : index
    %3 = vector.load %arg5[%c0_3, %c0_4] : memref<1x128xf32, #tpu.memory_space<vmem>>, vector<1x128xf32>
    %4 = vector.broadcast %3 : vector<1x128xf32> to vector<8x128xf32>
    %5 = arith.addf %2, %4 : vector<8x128xf32>
    %cst_5 = arith.constant 0.000000e+00 : f32
    %6 = vector.broadcast %cst_5 : f32 to vector<8x128xf32>
    %7 = arith.maximumf %5, %6 : vector<8x128xf32>
    %c0_6 = arith.constant 0 : index
    %c0_7 = arith.constant 0 : index
    %8 = vector.load %arg6[%c0_6, %c0_7] : memref<128x128xf32, #tpu.memory_space<vmem>>, vector<128x128xf32>
    %cst_8 = arith.constant dense<0.000000e+00> : vector<8x128xf32>
    %9 = tpu.matmul %7, %8, %cst_8 {dimension_numbers = #tpu.dot_dimension_numbers<[1], [0], [0], [1], [0, 0, 1, 1], [], []>} : vector<8x128xf32>, vector<128x128xf32>, vector<8x128xf32> -> vector<8x128xf32>
    %c0_9 = arith.constant 0 : index
    %c0_10 = arith.constant 0 : index
    %10 = vector.load %arg7[%c0_9, %c0_10] : memref<1x128xf32, #tpu.memory_space<vmem>>, vector<1x128xf32>
    %11 = vector.broadcast %10 : vector<1x128xf32> to vector<8x128xf32>
    %12 = arith.addf %9, %11 : vector<8x128xf32>
    %c0_11 = arith.constant 0 : index
    %c0_12 = arith.constant 0 : index
    %13 = vector.load %arg3[%c0_11, %c0_12] : memref<64x128xf32, #tpu.memory_space<vmem>>, vector<64x128xf32>
    %c0_13 = arith.constant 0 : index
    %c0_14 = arith.constant 0 : index
    %14 = vector.load %arg8[%c0_13, %c0_14] : memref<128x128xf32, #tpu.memory_space<vmem>>, vector<128x128xf32>
    %cst_15 = arith.constant dense<0.000000e+00> : vector<8x128xf32>
    %15 = tpu.matmul %12, %14, %cst_15 {dimension_numbers = #tpu.dot_dimension_numbers<[1], [0], [0], [1], [0, 0, 1, 1], [], []>} : vector<8x128xf32>, vector<128x128xf32>, vector<8x128xf32> -> vector<8x128xf32>
    %c0_16 = arith.constant 0 : index
    %c0_17 = arith.constant 0 : index
    %16 = vector.load %arg9[%c0_16, %c0_17] : memref<128x128xf32, #tpu.memory_space<vmem>>, vector<128x128xf32>
    %cst_18 = arith.constant dense<0.000000e+00> : vector<64x128xf32>
    %17 = tpu.matmul %13, %16, %cst_18 {dimension_numbers = #tpu.dot_dimension_numbers<[1], [0], [0], [1], [0, 0, 1, 1], [], []>} : vector<64x128xf32>, vector<128x128xf32>, vector<64x128xf32> -> vector<64x128xf32>
    %c0_19 = arith.constant 0 : index
    %c0_20 = arith.constant 0 : index
    %18 = vector.load %arg10[%c0_19, %c0_20] : memref<1x128xf32, #tpu.memory_space<vmem>>, vector<1x128xf32>
    %19 = vector.broadcast %18 : vector<1x128xf32> to vector<64x128xf32>
    %20 = arith.addf %17, %19 : vector<64x128xf32>
    %21 = vector.shape_cast %15 : vector<8x128xf32> to vector<8x1x128xf32>
    %22 = vector.shape_cast %20 : vector<64x128xf32> to vector<1x64x128xf32>
    %23 = vector.broadcast %21 : vector<8x1x128xf32> to vector<8x64x128xf32>
    %24 = vector.broadcast %22 : vector<1x64x128xf32> to vector<8x64x128xf32>
    %25 = arith.addf %23, %24 : vector<8x64x128xf32>
    %cst_21 = arith.constant 0.000000e+00 : f32
    %26 = vector.broadcast %cst_21 : f32 to vector<8x64x128xf32>
    %27 = arith.maximumf %25, %26 : vector<8x64x128xf32>
    %28 = vector.shape_cast %27 : vector<8x64x128xf32> to vector<512x128xf32>
    %c0_22 = arith.constant 0 : index
    %c0_23 = arith.constant 0 : index
    %29 = vector.load %arg11[%c0_22, %c0_23] : memref<128x64xf32, #tpu.memory_space<vmem>>, vector<128x64xf32>
    %cst_24 = arith.constant dense<0.000000e+00> : vector<512x64xf32>
    %30 = tpu.matmul %28, %29, %cst_24 {dimension_numbers = #tpu.dot_dimension_numbers<[1], [0], [0], [1], [0, 0, 1, 1], [], []>} : vector<512x128xf32>, vector<128x64xf32>, vector<512x64xf32> -> vector<512x64xf32>
    %c0_25 = arith.constant 0 : index
    %c0_26 = arith.constant 0 : index
    %31 = vector.load %arg12[%c0_25, %c0_26] : memref<1x64xf32, #tpu.memory_space<vmem>>, vector<1x64xf32>
    %32 = vector.broadcast %31 : vector<1x64xf32> to vector<512x64xf32>
    %33 = arith.addf %30, %32 : vector<512x64xf32>
    %cst_27 = arith.constant 0.000000e+00 : f32
    %34 = vector.broadcast %cst_27 : f32 to vector<512x64xf32>
    %35 = arith.maximumf %33, %34 : vector<512x64xf32>
    %c0_28 = arith.constant 0 : index
    %c0_29 = arith.constant 0 : index
    %36 = vector.load %arg13[%c0_28, %c0_29] : memref<64x128xf32, #tpu.memory_space<vmem>>, vector<64x128xf32>
    %cst_30 = arith.constant dense<0.000000e+00> : vector<512x128xf32>
    %37 = tpu.matmul %35, %36, %cst_30 {dimension_numbers = #tpu.dot_dimension_numbers<[1], [0], [0], [1], [0, 0, 1, 1], [], []>} : vector<512x64xf32>, vector<64x128xf32>, vector<512x128xf32> -> vector<512x128xf32>
    %c0_31 = arith.constant 0 : index
    %c0_32 = arith.constant 0 : index
    %38 = vector.load %arg14[%c0_31, %c0_32] : memref<1x128xf32, #tpu.memory_space<vmem>>, vector<1x128xf32>
    %39 = vector.broadcast %38 : vector<1x128xf32> to vector<512x128xf32>
    %40 = arith.addf %37, %39 : vector<512x128xf32>
    %41 = tpu.concatenate %13, %13, %13, %13, %13, %13, %13, %13 in 0 : vector<64x128xf32>, vector<64x128xf32>, vector<64x128xf32>, vector<64x128xf32>, vector<64x128xf32>, vector<64x128xf32>, vector<64x128xf32>, vector<64x128xf32> -> vector<512x128xf32>
    %c0_33 = arith.constant 0 : index
    %42 = memref.load %arg1[%c0_33] : memref<1xf32, #tpu.memory_space<smem>>
    %43 = vector.broadcast %42 : f32 to vector<512x128xf32>
    %44 = arith.mulf %40, %43 : vector<512x128xf32>
    %45 = arith.addf %41, %44 : vector<512x128xf32>
    %c0_34 = arith.constant 0 : index
    %c0_35 = arith.constant 0 : index
    %46 = vector.load %arg15[%c0_34, %c0_35] : memref<512x128xf32, #tpu.memory_space<vmem>>, vector<512x128xf32>
    tpu.vector_store %arg15[%c0_34, %c0_35], %45 {strides = array<i32>} : memref<512x128xf32, #tpu.memory_space<vmem>>, vector<512x128xf32>,
    return
  }
  func.func @transform_0(%arg0: i32) -> i32 {
    %c0_i32 = arith.constant 0 : i32
    %c0_i32_0 = arith.constant 0 : i32
    return %c0_i32 : i32
  }
  func.func @transform_1(%arg0: i32) -> (i32, i32) {
    %c0_i32 = arith.constant 0 : i32
    %c0_i32_0 = arith.constant 0 : i32
    return %arg0, %c0_i32 : i32, i32
  }
  func.func @transform_2(%arg0: i32) -> (i32, i32) {
    %c0_i32 = arith.constant 0 : i32
    %c0_i32_0 = arith.constant 0 : i32
    %c0_i32_1 = arith.constant 0 : i32
    return %c0_i32, %c0_i32_0 : i32, i32
  }
  func.func @transform_3(%arg0: i32) -> (i32, i32) {
    %c0_i32 = arith.constant 0 : i32
    %c0_i32_0 = arith.constant 0 : i32
    %c0_i32_1 = arith.constant 0 : i32
    return %c0_i32, %c0_i32_0 : i32, i32
  }
  func.func @transform_4(%arg0: i32) -> (i32, i32) {
    %c0_i32 = arith.constant 0 : i32
    %c0_i32_0 = arith.constant 0 : i32
    %c0_i32_1 = arith.constant 0 : i32
    return %c0_i32, %c0_i32_0 : i32, i32
  }
  func.func @transform_5(%arg0: i32) -> (i32, i32) {
    %c0_i32 = arith.constant 0 : i32
    %c0_i32_0 = arith.constant 0 : i32
    %c0_i32_1 = arith.constant 0 : i32
    return %c0_i32, %c0_i32_0 : i32, i32
  }
  func.func @transform_6(%arg0: i32) -> (i32, i32) {
    %c0_i32 = arith.constant 0 : i32
    %c0_i32_0 = arith.constant 0 : i32
    %c0_i32_1 = arith.constant 0 : i32
    return %c0_i32, %c0_i32_0 : i32, i32
  }
  func.func @transform_7(%arg0: i32) -> (i32, i32) {
    %c0_i32 = arith.constant 0 : i32
    %c0_i32_0 = arith.constant 0 : i32
    %c0_i32_1 = arith.constant 0 : i32
    return %c0_i32, %c0_i32_0 : i32, i32
  }
  func.func @transform_8(%arg0: i32) -> (i32, i32) {
    %c0_i32 = arith.constant 0 : i32
    %c0_i32_0 = arith.constant 0 : i32
    %c0_i32_1 = arith.constant 0 : i32
    return %c0_i32, %c0_i32_0 : i32, i32
  }
  func.func @transform_9(%arg0: i32) -> (i32, i32) {
    %c0_i32 = arith.constant 0 : i32
    %c0_i32_0 = arith.constant 0 : i32
    %c0_i32_1 = arith.constant 0 : i32
    return %c0_i32, %c0_i32_0 : i32, i32
  }
  func.func @transform_10(%arg0: i32) -> (i32, i32) {
    %c0_i32 = arith.constant 0 : i32
    %c0_i32_0 = arith.constant 0 : i32
    %c0_i32_1 = arith.constant 0 : i32
    return %c0_i32, %c0_i32_0 : i32, i32
  }
  func.func @transform_11(%arg0: i32) -> (i32, i32) {
    %c0_i32 = arith.constant 0 : i32
    %c0_i32_0 = arith.constant 0 : i32
    %c0_i32_1 = arith.constant 0 : i32
    return %c0_i32, %c0_i32_0 : i32, i32
  }
  func.func @transform_12(%arg0: i32) -> (i32, i32) {
    %c0_i32 = arith.constant 0 : i32
    %c0_i32_0 = arith.constant 0 : i32
    %c0_i32_1 = arith.constant 0 : i32
    return %c0_i32, %c0_i32_0 : i32, i32
  }
  func.func @transform_13(%arg0: i32) -> (i32, i32) {
    %c0_i32 = arith.constant 0 : i32
    %c0_i32_0 = arith.constant 0 : i32
    %c0_i32_1 = arith.constant 0 : i32
    return %c0_i32, %c0_i32_0 : i32, i32
  }
  func.func @transform_14(%arg0: i32) -> (i32, i32) {
    %c0_i32 = arith.constant 0 : i32
    %c0_i32_0 = arith.constant 0 : i32
    return %arg0, %c0_i32 : i32, i32
  }
}

</mosaic_0001>

<llo_original>
// kernel: shape_decoder_forward.1
$region0: #{shape_decoder_forward.1}
  #allocation0 [shape = 'u32[]', space=smem, size = 0x4, offset = 0x4, fixed_abs, tag = 'smem constant byte address 0x4 - core index']
  #allocation1 [shape = 'u32[144,128]{1,0:T(1,128)}', space=vmem, size = 0x12000, scoped, tag = 'internal scratch']
  #allocation2 [shape = 'f32[1]{0:T(128)S(6)}', space=smem, size = 0x200, scoped, tag = 'scoped memory for shape_decoder_forward.1']
  %s0 = inlined_call_operand.<no memory space> [shape: f32[1], index: 0, kind: input, shape index: {}]
  %s1 = inlined_call_operand.vmem [shape: f32[8,128], index: 1, kind: input, shape index: {}]
  %s2 = inlined_call_operand.vmem [shape: f32[64,128], index: 2, kind: input, shape index: {}]
  %s3 = inlined_call_operand.vmem [shape: f32[128,128], index: 3, kind: input, shape index: {}]
  %s4 = inlined_call_operand.vmem [shape: f32[1,128], index: 4, kind: input, shape index: {}]
  %s5 = inlined_call_operand.vmem [shape: f32[128,128], index: 5, kind: input, shape index: {}]
  %s6 = inlined_call_operand.vmem [shape: f32[1,128], index: 6, kind: input, shape index: {}]
  %s7 = inlined_call_operand.vmem [shape: f32[128,128], index: 7, kind: input, shape index: {}]
  %s8 = inlined_call_operand.vmem [shape: f32[128,128], index: 8, kind: input, shape index: {}]
  %s9 = inlined_call_operand.vmem [shape: f32[1,128], index: 9, kind: input, shape index: {}]
  %s10 = inlined_call_operand.vmem [shape: f32[128,64], index: 10, kind: input, shape index: {}]
  %s11 = inlined_call_operand.vmem [shape: f32[1,64], index: 11, kind: input, shape index: {}]
  %s12 = inlined_call_operand.vmem [shape: f32[64,128], index: 12, kind: input, shape index: {}]
  %s13 = inlined_call_operand.vmem [shape: f32[1,128], index: 13, kind: input, shape index: {}]
  %s14 = inlined_call_operand.vmem [shape: f32[512,128], index: 14, kind: output, shape index: {}]
  %s15 = sld [smem:[#allocation0]]
  $region66: #{shape_decoder_forward.1} parent=0
    _
  %s17 = ssub.s32 1, %s15
  %s18 = scalar_select 0, %s17, %s15
  %19 = sst [smem:[#allocation2]] %s0
  // Predicated region
  $region2: #{shape_decoder_forward.1} parent=0 // pred_check
    _
  $region3: #{shape_decoder_forward.1} parent=0 // pred_check_branch
    %21 = sbr.rel (0) target = $region5
  $region4: #{shape_decoder_forward.1} parent=0 // pred_region
    _
  $region5: #{shape_decoder_forward.1} parent=0 // pred_fallthru
    _
  // Predicated region
  $region6: #{shape_decoder_forward.1} parent=0 // pred_check
    _
  $region7: #{shape_decoder_forward.1} parent=0 // pred_check_branch
    %23 = sbr.rel (0) target = $region9
  $region8: #{shape_decoder_forward.1} parent=0 // pred_region
    _
  $region9: #{shape_decoder_forward.1} parent=0 // pred_fallthru
    _
  // Predicated region
  $region10: #{shape_decoder_forward.1} parent=0 // pred_check
    _
  $region11: #{shape_decoder_forward.1} parent=0 // pred_check_branch
    %25 = sbr.rel (0) target = $region13
  $region12: #{shape_decoder_forward.1} parent=0 // pred_region
    _
  $region13: #{shape_decoder_forward.1} parent=0 // pred_fallthru
    _
  // Predicated region
  $region14: #{shape_decoder_forward.1} parent=0 // pred_check
    _
  $region15: #{shape_decoder_forward.1} parent=0 // pred_check_branch
    %27 = sbr.rel (0) target = $region17
  $region16: #{shape_decoder_forward.1} parent=0 // pred_region
    _
  $region17: #{shape_decoder_forward.1} parent=0 // pred_fallthru
    _
  // Predicated region
  $region18: #{shape_decoder_forward.1} parent=0 // pred_check
    _
  $region19: #{shape_decoder_forward.1} parent=0 // pred_check_branch
    %29 = sbr.rel (0) target = $region21
  $region20: #{shape_decoder_forward.1} parent=0 // pred_region
    _
  $region21: #{shape_decoder_forward.1} parent=0 // pred_fallthru
    _
  // Predicated region
  $region22: #{shape_decoder_forward.1} parent=0 // pred_check
    _
  $region23: #{shape_decoder_forward.1} parent=0 // pred_check_branch
    %31 = sbr.rel (0) target = $region25
  $region24: #{shape_decoder_forward.1} parent=0 // pred_region
    _
  $region25: #{shape_decoder_forward.1} parent=0 // pred_fallthru
    _
  // Predicated region
  $region26: #{shape_decoder_forward.1} parent=0 // pred_check
    _
  $region27: #{shape_decoder_forward.1} parent=0 // pred_check_branch
    %33 = sbr.rel (0) target = $region29
  $region28: #{shape_decoder_forward.1} parent=0 // pred_region
    _
  $region29: #{shape_decoder_forward.1} parent=0 // pred_fallthru
    _
  // Predicated region
  $region30: #{shape_decoder_forward.1} parent=0 // pred_check
    _
  $region31: #{shape_decoder_forward.1} parent=0 // pred_check_branch
    %35 = sbr.rel (0) target = $region33
  $region32: #{shape_decoder_forward.1} parent=0 // pred_region
    _
  $region33: #{shape_decoder_forward.1} parent=0 // pred_fallthru
    _
  // Predicated region
  $region34: #{shape_decoder_forward.1} parent=0 // pred_check
    _
  $region35: #{shape_decoder_forward.1} parent=0 // pred_check_branch
    %37 = sbr.rel (0) target = $region37
  $region36: #{shape_decoder_forward.1} parent=0 // pred_region
    _
  $region37: #{shape_decoder_forward.1} parent=0 // pred_fallthru
    _
  // Predicated region
  $region38: #{shape_decoder_forward.1} parent=0 // pred_check
    _
  $region39: #{shape_decoder_forward.1} parent=0 // pred_check_branch
    %39 = sbr.rel (0) target = $region41
  $region40: #{shape_decoder_forward.1} parent=0 // pred_region
    _
  $region41: #{shape_decoder_forward.1} parent=0 // pred_fallthru
    _
  // Predicated region
  $region42: #{shape_decoder_forward.1} parent=0 // pred_check
    _
  $region43: #{shape_decoder_forward.1} parent=0 // pred_check_branch
    %41 = sbr.rel (0) target = $region45
  $region44: #{shape_decoder_forward.1} parent=0 // pred_region
    _
  $region45: #{shape_decoder_forward.1} parent=0 // pred_fallthru
    _
  // Predicated region
  $region46: #{shape_decoder_forward.1} parent=0 // pred_check
    _
  $region47: #{shape_decoder_forward.1} parent=0 // pred_check_branch
    %43 = sbr.rel (0) target = $region49
  $region48: #{shape_decoder_forward.1} parent=0 // pred_region
    _
  $region49: #{shape_decoder_forward.1} parent=0 // pred_fallthru
    _
  // Predicated region
  $region50: #{shape_decoder_forward.1} parent=0 // pred_check
    _
  $region51: #{shape_decoder_forward.1} parent=0 // pred_check_branch
    %45 = sbr.rel (0) target = $region53
  $region52: #{shape_decoder_forward.1} parent=0 // pred_region
    _
  $region53: #{shape_decoder_forward.1} parent=0 // pred_fallthru
    _
  // Predicated region
  $region54: #{shape_decoder_forward.1} parent=0 // pred_check
    _
  $region55: #{shape_decoder_forward.1} parent=0 // pred_check_branch
    %47 = sbr.rel (0) target = $region57
  $region56: #{shape_decoder_forward.1} parent=0 // pred_region
    _
  $region57: #{shape_decoder_forward.1} parent=0 // pred_fallthru
    _
  %v48 = vld [vmem:[%s1] sm:$0xff]
  %v49 = vld [vmem:[%s3] sm:$0xff]
  %v50 = vld [vmem:[%s3 + $0x8] sm:$0xff]
  %v51 = vld [vmem:[%s3 + $0x10] sm:$0xff]
  %v52 = vld [vmem:[%s3 + $0x18] sm:$0xff]
  %v53 = vld [vmem:[%s3 + $0x20] sm:$0xff]
  %v54 = vld [vmem:[%s3 + $0x28] sm:$0xff]
  %v55 = vld [vmem:[%s3 + $0x30] sm:$0xff]
  %v56 = vld [vmem:[%s3 + $0x38] sm:$0xff]
  %v57 = vld [vmem:[%s3 + $0x40] sm:$0xff]
  %v58 = vld [vmem:[%s3 + $0x48] sm:$0xff]
  %v59 = vld [vmem:[%s3 + $0x50] sm:$0xff]
  %v60 = vld [vmem:[%s3 + $0x58] sm:$0xff]
  %v61 = vld [vmem:[%s3 + $0x60] sm:$0xff]
  %v62 = vld [vmem:[%s3 + $0x68] sm:$0xff]
  %v63 = vld [vmem:[%s3 + $0x70] sm:$0xff]
  %v64 = vld [vmem:[%s3 + $0x78] sm:$0xff]
  %v65 = vld [vmem:[%s4] sm:$0x1]
  %v67 = vlaneseq
  %v68 = vshrl.u32 %v67, 7
  %v69 = vsub.s32 0, %v68
  %v70 = vrot.slane %v65, %v69
  %72 = vmatprep.subr.mxu0 0.0
  %73 = vmatpush1.msra.mxu0 %v49
  %74 = vmatprep.subr.mxu0 0.0
  %75 = vmatpush1.msra.mxu0 %v50
  %76 = vmatprep.subr.mxu0 0.0
  %77 = vmatpush1.msra.mxu0 %v51
  %78 = vmatprep.subr.mxu0 0.0
  %79 = vmatpush1.msra.mxu0 %v52
  %80 = vmatprep.subr.mxu0 0.0
  %81 = vmatpush1.msra.mxu0 %v53
  %82 = vmatprep.subr.mxu0 0.0
  %83 = vmatpush1.msra.mxu0 %v54
  %84 = vmatprep.subr.mxu0 0.0
  %85 = vmatpush1.msra.mxu0 %v55
  %86 = vmatprep.subr.mxu0 0.0
  %87 = vmatpush1.msra.mxu0 %v56
  %88 = vmatprep.subr.mxu0 0.0
  %89 = vmatpush1.msra.mxu0 %v57
  %90 = vmatprep.subr.mxu0 0.0
  %91 = vmatpush1.msra.mxu0 %v58
  %92 = vmatprep.subr.mxu0 0.0
  %93 = vmatpush1.msra.mxu0 %v59
  %94 = vmatprep.subr.mxu0 0.0
  %95 = vmatpush1.msra.mxu0 %v60
  %96 = vmatprep.subr.mxu0 0.0
  %97 = vmatpush1.msra.mxu0 %v61
  %98 = vmatprep.subr.mxu0 0.0
  %99 = vmatpush1.msra.mxu0 %v62
  %100 = vmatprep.subr.mxu0 0.0
  %101 = vmatpush1.msra.mxu0 %v63
  %102 = vmatprep.subr.mxu0 0.0
  %103 = vmatpush1.msra.mxu0 %v64
  %104 = vmatprep.subr.mxu0 0.0
  %105 = vmatpush1.msra.mxu0 0.0
  %106 = vmatprep.subr.mxu0 0.0
  %107 = vmatpush1.msra.mxu0 0.0
  %108 = vmatprep.subr.mxu0 0.0
  %109 = vmatpush1.msra.mxu0 0.0
  %110 = vmatprep.subr.mxu0 0.0
  %111 = vmatpush1.msra.mxu0 0.0
  %112 = vmatprep.subr.mxu0 0.0
  %113 = vmatpush1.msra.mxu0 0.0
  %114 = vmatprep.subr.mxu0 0.0
  %115 = vmatpush1.msra.mxu0 0.0
  %116 = vmatprep.subr.mxu0 0.0
  %117 = vmatpush1.msra.mxu0 0.0
  %118 = vmatprep.subr.mxu0 0.0
  %119 = vmatpush1.msra.mxu0 0.0
  %120 = vmatprep.subr.mxu0 0.0
  %121 = vmatpush1.msra.mxu0 0.0
  %122 = vmatprep.subr.mxu0 0.0
  %123 = vmatpush1.msra.mxu0 0.0
  %124 = vmatprep.subr.mxu0 0.0
  %125 = vmatpush1.msra.mxu0 0.0
  %126 = vmatprep.subr.mxu0 0.0
  %127 = vmatpush1.msra.mxu0 0.0
  %128 = vmatprep.subr.mxu0 0.0
  %129 = vmatpush1.msra.mxu0 0.0
  %130 = vmatprep.subr.mxu0 0.0
  %131 = vmatpush1.msra.mxu0 0.0
  %132 = vmatprep.subr.mxu0 0.0
  %133 = vmatpush1.msra.mxu0 0.0
  %134 = vmatprep.subr.mxu0 0.0
  %135 = vmatpush1.msra.mxu0 0.0
  %136 = vmatprep.mubr.f32.mxu0 0.0
  %137 = vmatmul.mubr.f32.gmra.mrb[0].mxu0 %v48
  %v138 = vpop.f32.mrb[0].mxu0
  %v139 = vadd.f32 %v70, %v138
  %v140 = vpop.f32.mrb[0].mxu0
  %141 = vdwg.mxu0
  %v142 = vmax.f32 %v139, 0.0
  %v143 = vld [vmem:[%s5] sm:$0xff]
  %v144 = vld [vmem:[%s5 + $0x8] sm:$0xff]
  %v145 = vld [vmem:[%s5 + $0x10] sm:$0xff]
  %v146 = vld [vmem:[%s5 + $0x18] sm:$0xff]
  %v147 = vld [vmem:[%s5 + $0x20] sm:$0xff]
  %v148 = vld [vmem:[%s5 + $0x28] sm:$0xff]
  %v149 = vld [vmem:[%s5 + $0x30] sm:$0xff]
  %v150 = vld [vmem:[%s5 + $0x38] sm:$0xff]
  %v151 = vld [vmem:[%s5 + $0x40] sm:$0xff]
  %v152 = vld [vmem:[%s5 + $0x48] sm:$0xff]
  %v153 = vld [vmem:[%s5 + $0x50] sm:$0xff]
  %v154 = vld [vmem:[%s5 + $0x58] sm:$0xff]
  %v155 = vld [vmem:[%s5 + $0x60] sm:$0xff]
  %v156 = vld [vmem:[%s5 + $0x68] sm:$0xff]
  %v157 = vld [vmem:[%s5 + $0x70] sm:$0xff]
  %v158 = vld [vmem:[%s5 + $0x78] sm:$0xff]
  %v159 = vld [vmem:[%s6] sm:$0x1]
  %v161 = vlaneseq
  %v162 = vshrl.u32 %v161, 7
  %v163 = vsub.s32 0, %v162
  %v164 = vrot.slane %v159, %v163
  %166 = vmatprep.subr.mxu0 0.0
  %167 = vmatpush1.msra.mxu0 %v143
  %168 = vmatprep.subr.mxu0 0.0
  %169 = vmatpush1.msra.mxu0 %v144
  %170 = vmatprep.subr.mxu0 0.0
  %171 = vmatpush1.msra.mxu0 %v145
  %172 = vmatprep.subr.mxu0 0.0
  %173 = vmatpush1.msra.mxu0 %v146
  %174 = vmatprep.subr.mxu0 0.0
  %175 = vmatpush1.msra.mxu0 %v147
  %176 = vmatprep.subr.mxu0 0.0
  %177 = vmatpush1.msra.mxu0 %v148
  %178 = vmatprep.subr.mxu0 0.0
  %179 = vmatpush1.msra.mxu0 %v149
  %180 = vmatprep.subr.mxu0 0.0
  %181 = vmatpush1.msra.mxu0 %v150
  %182 = vmatprep.subr.mxu0 0.0
  %183 = vmatpush1.msra.mxu0 %v151
  %184 = vmatprep.subr.mxu0 0.0
  %185 = vmatpush1.msra.mxu0 %v152
  %186 = vmatprep.subr.mxu0 0.0
  %187 = vmatpush1.msra.mxu0 %v153
  %188 = vmatprep.subr.mxu0 0.0
  %189 = vmatpush1.msra.mxu0 %v154
  %190 = vmatprep.subr.mxu0 0.0
  %191 = vmatpush1.msra.mxu0 %v155
  %192 = vmatprep.subr.mxu0 0.0
  %193 = vmatpush1.msra.mxu0 %v156
  %194 = vmatprep.subr.mxu0 0.0
  %195 = vmatpush1.msra.mxu0 %v157
  %196 = vmatprep.subr.mxu0 0.0
  %197 = vmatpush1.msra.mxu0 %v158
  %198 = vmatprep.subr.mxu0 0.0
  %199 = vmatpush1.msra.mxu0 0.0
  %200 = vmatprep.subr.mxu0 0.0
  %201 = vmatpush1.msra.mxu0 0.0
  %202 = vmatprep.subr.mxu0 0.0
  %203 = vmatpush1.msra.mxu0 0.0
  %204 = vmatprep.subr.mxu0 0.0
  %205 = vmatpush1.msra.mxu0 0.0
  %206 = vmatprep.subr.mxu0 0.0
  %207 = vmatpush1.msra.mxu0 0.0
  %208 = vmatprep.subr.mxu0 0.0
  %209 = vmatpush1.msra.mxu0 0.0
  %210 = vmatprep.subr.mxu0 0.0
  %211 = vmatpush1.msra.mxu0 0.0
  %212 = vmatprep.subr.mxu0 0.0
  %213 = vmatpush1.msra.mxu0 0.0
  %214 = vmatprep.subr.mxu0 0.0
  %215 = vmatpush1.msra.mxu0 0.0
  %216 = vmatprep.subr.mxu0 0.0
  %217 = vmatpush1.msra.mxu0 0.0
  %218 = vmatprep.subr.mxu0 0.0
  %219 = vmatpush1.msra.mxu0 0.0
  %220 = vmatprep.subr.mxu0 0.0
  %221 = vmatpush1.msra.mxu0 0.0
  %222 = vmatprep.subr.mxu0 0.0
  %223 = vmatpush1.msra.mxu0 0.0
  %224 = vmatprep.subr.mxu0 0.0
  %225 = vmatpush1.msra.mxu0 0.0
  %226 = vmatprep.subr.mxu0 0.0
  %227 = vmatpush1.msra.mxu0 0.0
  %228 = vmatprep.subr.mxu0 0.0
  %229 = vmatpush1.msra.mxu0 0.0
  %230 = vmatprep.mubr.f32.mxu0 0.0
  %231 = vmatmul.mubr.f32.gmra.mrb[0].mxu0 %v142
  %v232 = vpop.f32.mrb[0].mxu0
  %v233 = vadd.f32 %v164, %v232
  %v234 = vpop.f32.mrb[0].mxu0
  %235 = vdwg.mxu0
  %v236 = vld [vmem:[%s2] sm:$0xff]
  %v237 = vld [vmem:[%s2 + $0x8] sm:$0xff]
  %v238 = vld [vmem:[%s2 + $0x10] sm:$0xff]
  %v239 = vld [vmem:[%s2 + $0x18] sm:$0xff]
  %v240 = vld [vmem:[%s2 + $0x20] sm:$0xff]
  %v241 = vld [vmem:[%s2 + $0x28] sm:$0xff]
  %v242 = vld [vmem:[%s2 + $0x30] sm:$0xff]
  %v243 = vld [vmem:[%s2 + $0x38] sm:$0xff]
  %v244 = vld [vmem:[%s7] sm:$0xff]
  %v245 = vld [vmem:[%s7 + $0x8] sm:$0xff]
  %v246 = vld [vmem:[%s7 + $0x10] sm:$0xff]
  %v247 = vld [vmem:[%s7 + $0x18] sm:$0xff]
  %v248 = vld [vmem:[%s7 + $0x20] sm:$0xff]
  %v249 = vld [vmem:[%s7 + $0x28] sm:$0xff]
  %v250 = vld [vmem:[%s7 + $0x30] sm:$0xff]
  %v251 = vld [vmem:[%s7 + $0x38] sm:$0xff]
  %v252 = vld [vmem:[%s7 + $0x40] sm:$0xff]
  %v253 = vld [vmem:[%s7 + $0x48] sm:$0xff]
  %v254 = vld [vmem:[%s7 + $0x50] sm:$0xff]
  %v255 = vld [vmem:[%s7 + $0x58] sm:$0xff]
  %v256 = vld [vmem:[%s7 + $0x60] sm:$0xff]
  %v257 = vld [vmem:[%s7 + $0x68] sm:$0xff]
  %v258 = vld [vmem:[%s7 + $0x70] sm:$0xff]
  %v259 = vld [vmem:[%s7 + $0x78] sm:$0xff]
  %260 = vmatprep.subr.mxu0 0.0
  %261 = vmatpush1.msra.mxu0 %v244
  %262 = vmatprep.subr.mxu0 0.0
  %263 = vmatpush1.msra.mxu0 %v245
  %264 = vmatprep.subr.mxu0 0.0
  %265 = vmatpush1.msra.mxu0 %v246
  %266 = vmatprep.subr.mxu0 0.0
  %267 = vmatpush1.msra.mxu0 %v247
  %268 = vmatprep.subr.mxu0 0.0
  %269 = vmatpush1.msra.mxu0 %v248
  %270 = vmatprep.subr.mxu0 0.0
  %271 = vmatpush1.msra.mxu0 %v249
  %272 = vmatprep.subr.mxu0 0.0
  %273 = vmatpush1.msra.mxu0 %v250
  %274 = vmatprep.subr.mxu0 0.0
  %275 = vmatpush1.msra.mxu0 %v251
  %276 = vmatprep.subr.mxu0 0.0
  %277 = vmatpush1.msra.mxu0 %v252
  %278 = vmatprep.subr.mxu0 0.0
  %279 = vmatpush1.msra.mxu0 %v253
  %280 = vmatprep.subr.mxu0 0.0
  %281 = vmatpush1.msra.mxu0 %v254
  %282 = vmatprep.subr.mxu0 0.0
  %283 = vmatpush1.msra.mxu0 %v255
  %284 = vmatprep.subr.mxu0 0.0
  %285 = vmatpush1.msra.mxu0 %v256
  %286 = vmatprep.subr.mxu0 0.0
  %287 = vmatpush1.msra.mxu0 %v257
  %288 = vmatprep.subr.mxu0 0.0
  %289 = vmatpush1.msra.mxu0 %v258
  %290 = vmatprep.subr.mxu0 0.0
  %291 = vmatpush1.msra.mxu0 %v259
  %292 = vmatprep.subr.mxu0 0.0
  %293 = vmatpush1.msra.mxu0 0.0
  %294 = vmatprep.subr.mxu0 0.0
  %295 = vmatpush1.msra.mxu0 0.0
  %296 = vmatprep.subr.mxu0 0.0
  %297 = vmatpush1.msra.mxu0 0.0
  %298 = vmatprep.subr.mxu0 0.0
  %299 = vmatpush1.msra.mxu0 0.0
  %300 = vmatprep.subr.mxu0 0.0
  %301 = vmatpush1.msra.mxu0 0.0
  %302 = vmatprep.subr.mxu0 0.0
  %303 = vmatpush1.msra.mxu0 0.0
  %304 = vmatprep.subr.mxu0 0.0
  %305 = vmatpush1.msra.mxu0 0.0
  %306 = vmatprep.subr.mxu0 0.0
  %307 = vmatpush1.msra.mxu0 0.0
  %308 = vmatprep.subr.mxu0 0.0
  %309 = vmatpush1.msra.mxu0 0.0
  %310 = vmatprep.subr.mxu0 0.0
  %311 = vmatpush1.msra.mxu0 0.0
  %312 = vmatprep.subr.mxu0 0.0
  %313 = vmatpush1.msra.mxu0 0.0
  %314 = vmatprep.subr.mxu0 0.0
  %315 = vmatpush1.msra.mxu0 0.0
  %316 = vmatprep.subr.mxu0 0.0
  %317 = vmatpush1.msra.mxu0 0.0
  %318 = vmatprep.subr.mxu0 0.0
  %319 = vmatpush1.msra.mxu0 0.0
  %320 = vmatprep.subr.mxu0 0.0
  %321 = vmatpush1.msra.mxu0 0.0
  %322 = vmatprep.subr.mxu0 0.0
  %323 = vmatpush1.msra.mxu0 0.0
  %324 = vmatprep.mubr.f32.mxu0 0.0
  %325 = vmatmul.mubr.f32.gmra.mrb[0].mxu0 %v233
  %v326 = vpop.f32.mrb[0].mxu0
  %v327 = vadd.f32 0.0, %v326
  %v328 = vpop.f32.mrb[0].mxu0
  %329 = vdwg.mxu0
  %v330 = vld [vmem:[%s8] sm:$0xff]
  %v331 = vld [vmem:[%s8 + $0x8] sm:$0xff]
  %v332 = vld [vmem:[%s8 + $0x10] sm:$0xff]
  %v333 = vld [vmem:[%s8 + $0x18] sm:$0xff]
  %v334 = vld [vmem:[%s8 + $0x20] sm:$0xff]
  %v335 = vld [vmem:[%s8 + $0x28] sm:$0xff]
  %v336 = vld [vmem:[%s8 + $0x30] sm:$0xff]
  %v337 = vld [vmem:[%s8 + $0x38] sm:$0xff]
  %v338 = vld [vmem:[%s8 + $0x40] sm:$0xff]
  %v339 = vld [vmem:[%s8 + $0x48] sm:$0xff]
  %v340 = vld [vmem:[%s8 + $0x50] sm:$0xff]
  %v341 = vld [vmem:[%s8 + $0x58] sm:$0xff]
  %v342 = vld [vmem:[%s8 + $0x60] sm:$0xff]
  %v343 = vld [vmem:[%s8 + $0x68] sm:$0xff]
  %v344 = vld [vmem:[%s8 + $0x70] sm:$0xff]
  %v345 = vld [vmem:[%s8 + $0x78] sm:$0xff]
  %v346 = vld [vmem:[%s9] sm:$0x1]
  %v348 = vlaneseq
  %v349 = vshrl.u32 %v348, 7
  %v350 = vsub.s32 0, %v349
  %v351 = vrot.slane %v346, %v350
  %353 = vmatprep.subr.mxu0 0.0
  %354 = vmatpush1.msra.mxu0 %v330
  %355 = vmatprep.subr.mxu0 0.0
  %356 = vmatpush1.msra.mxu0 %v331
  %357 = vmatprep.subr.mxu0 0.0
  %358 = vmatpush1.msra.mxu0 %v332
  %359 = vmatprep.subr.mxu0 0.0
  %360 = vmatpush1.msra.mxu0 %v333
  %361 = vmatprep.subr.mxu0 0.0
  %362 = vmatpush1.msra.mxu0 %v334
  %363 = vmatprep.subr.mxu0 0.0
  %364 = vmatpush1.msra.mxu0 %v335
  %365 = vmatprep.subr.mxu0 0.0
  %366 = vmatpush1.msra.mxu0 %v336
  %367 = vmatprep.subr.mxu0 0.0
  %368 = vmatpush1.msra.mxu0 %v337
  %369 = vmatprep.subr.mxu0 0.0
  %370 = vmatpush1.msra.mxu0 %v338
  %371 = vmatprep.subr.mxu0 0.0
  %372 = vmatpush1.msra.mxu0 %v339
  %373 = vmatprep.subr.mxu0 0.0
  %374 = vmatpush1.msra.mxu0 %v340
  %375 = vmatprep.subr.mxu0 0.0
  %376 = vmatpush1.msra.mxu0 %v341
  %377 = vmatprep.subr.mxu0 0.0
  %378 = vmatpush1.msra.mxu0 %v342
  %379 = vmatprep.subr.mxu0 0.0
  %380 = vmatpush1.msra.mxu0 %v343
  %381 = vmatprep.subr.mxu0 0.0
  %382 = vmatpush1.msra.mxu0 %v344
  %383 = vmatprep.subr.mxu0 0.0
  %384 = vmatpush1.msra.mxu0 %v345
  %385 = vmatprep.subr.mxu0 0.0
  %386 = vmatpush1.msra.mxu0 0.0
  %387 = vmatprep.subr.mxu0 0.0
  %388 = vmatpush1.msra.mxu0 0.0
  %389 = vmatprep.subr.mxu0 0.0
  %390 = vmatpush1.msra.mxu0 0.0
  %391 = vmatprep.subr.mxu0 0.0
  %392 = vmatpush1.msra.mxu0 0.0
  %393 = vmatprep.subr.mxu0 0.0
  %394 = vmatpush1.msra.mxu0 0.0
  %395 = vmatprep.subr.mxu0 0.0
  %396 = vmatpush1.msra.mxu0 0.0
  %397 = vmatprep.subr.mxu0 0.0
  %398 = vmatpush1.msra.mxu0 0.0
  %399 = vmatprep.subr.mxu0 0.0
  %400 = vmatpush1.msra.mxu0 0.0
  %401 = vmatprep.subr.mxu0 0.0
  %402 = vmatpush1.msra.mxu0 0.0
  %403 = vmatprep.subr.mxu0 0.0
  %404 = vmatpush1.msra.mxu0 0.0
  %405 = vmatprep.subr.mxu0 0.0
  %406 = vmatpush1.msra.mxu0 0.0
  %407 = vmatprep.subr.mxu0 0.0
  %408 = vmatpush1.msra.mxu0 0.0
  %409 = vmatprep.subr.mxu0 0.0
  %410 = vmatpush1.msra.mxu0 0.0
  %411 = vmatprep.subr.mxu0 0.0
  %412 = vmatpush1.msra.mxu0 0.0
  %413 = vmatprep.subr.mxu0 0.0
  %414 = vmatpush1.msra.mxu0 0.0
  %415 = vmatprep.subr.mxu0 0.0
  %416 = vmatpush1.msra.mxu0 0.0
  %417 = vmatprep.mubr.f32.mxu0 0.0
  %418 = vmatmul.mubr.f32.gmra.mrb[0].mxu0 %v236
  %v419 = vpop.f32.mrb[0].mxu0
  %v420 = vadd.f32 %v351, %v419
  %v421 = vpop.f32.mrb[0].mxu0
  %422 = vmatprep.mubr.f32.mxu0 0.0
  %423 = vmatmul.mubr.f32.gmra.mrb[0].mxu0 %v237
  %v424 = vpop.f32.mrb[0].mxu0
  %v425 = vadd.f32 %v351, %v424
  %v426 = vpop.f32.mrb[0].mxu0
  %427 = vmatprep.mubr.f32.mxu0 0.0
  %428 = vmatmul.mubr.f32.gmra.mrb[0].mxu0 %v238
  %v429 = vpop.f32.mrb[0].mxu0
  %v430 = vadd.f32 %v351, %v429
  %v431 = vpop.f32.mrb[0].mxu0
  %432 = vmatprep.mubr.f32.mxu0 0.0
  %433 = vmatmul.mubr.f32.gmra.mrb[0].mxu0 %v239
  %v434 = vpop.f32.mrb[0].mxu0
  %v435 = vadd.f32 %v351, %v434
  %v436 = vpop.f32.mrb[0].mxu0
  %437 = vmatprep.mubr.f32.mxu0 0.0
  %438 = vmatmul.mubr.f32.gmra.mrb[0].mxu0 %v240
  %v439 = vpop.f32.mrb[0].mxu0
  %v440 = vadd.f32 %v351, %v439
  %v441 = vpop.f32.mrb[0].mxu0
  %442 = vmatprep.mubr.f32.mxu0 0.0
  %443 = vmatmul.mubr.f32.gmra.mrb[0].mxu0 %v241
  %v444 = vpop.f32.mrb[0].mxu0
  %v445 = vadd.f32 %v351, %v444
  %v446 = vpop.f32.mrb[0].mxu0
  %447 = vmatprep.mubr.f32.mxu0 0.0
  %448 = vmatmul.mubr.f32.gmra.mrb[0].mxu0 %v242
  %v449 = vpop.f32.mrb[0].mxu0
  %v450 = vadd.f32 %v351, %v449
  %v451 = vpop.f32.mrb[0].mxu0
  %452 = vmatprep.mubr.f32.mxu0 0.0
  %453 = vmatmul.mubr.f32.gmra.mrb[0].mxu0 %v243
  %v454 = vpop.f32.mrb[0].mxu0
  %v455 = vadd.f32 %v351, %v454
  %v456 = vpop.f32.mrb[0].mxu0
  %457 = vdwg.mxu0
  %v459 = vcombine.high %v327, %v327
  %v461 = vunpack.c.l.s4 1966171168
  %v462 = vunpack.c.0.s8 %v461
  %v463 = vlaneseq
  %v464 = vshrl.u32 %v463, 7
  %v465 = vsub.s32 %v462, %v464
  %v466 = vrot.slane %v327, %v465
  %v468 = vunpack.c.l.s4 1966171168
  %v469 = vunpack.c.0.s8 %v468
  %v470 = vlaneseq
  %v471 = vshrl.u32 %v470, 7
  %v472 = vsub.s32 %v469, %v471
  %v473 = vrot.slane %v459, %v472
  %v474 = vcombine.high %v466, %v466
  %v475 = vcombine.high %v473, %v473
  %v477 = vunpack.c.l.s4 1966171168
  %v478 = vunpack.c.0.s8 %v477
  %v479 = vlaneseq
  %v480 = vshrl.u32 %v479, 7
  %v481 = vsub.s32 %v478, %v480
  %v482 = vrot.slane %v466, %v481
  %v484 = vunpack.c.l.s4 1966171168
  %v485 = vunpack.c.0.s8 %v484
  %v486 = vlaneseq
  %v487 = vshrl.u32 %v486, 7
  %v488 = vsub.s32 %v485, %v487
  %v489 = vrot.slane %v473, %v488
  %v491 = vunpack.c.l.s4 1966171168
  %v492 = vunpack.c.0.s8 %v491
  %v493 = vlaneseq
  %v494 = vshrl.u32 %v493, 7
  %v495 = vsub.s32 %v492, %v494
  %v496 = vrot.slane %v474, %v495
  %v498 = vunpack.c.l.s4 1966171168
  %v499 = vunpack.c.0.s8 %v498
  %v500 = vlaneseq
  %v501 = vshrl.u32 %v500, 7
  %v502 = vsub.s32 %v499, %v501
  %v503 = vrot.slane %v475, %v502
  %v504 = vcombine.high %v482, %v482
  %v505 = vcombine.high %v489, %v489
  %v506 = vcombine.high %v496, %v496
  %v507 = vcombine.high %v503, %v503
  %v508 = vlaneseq
  %v509 = vshrl.u32 %v508, 7
  %v510 = vsub.s32 0, %v509
  %v511 = vrot.slane %v482, %v510
  %v512 = vlaneseq
  %v513 = vshrl.u32 %v512, 7
  %v514 = vsub.s32 0, %v513
  %v515 = vrot.slane %v496, %v514
  %v516 = vlaneseq
  %v517 = vshrl.u32 %v516, 7
  %v518 = vsub.s32 0, %v517
  %v519 = vrot.slane %v504, %v518
  %v520 = vlaneseq
  %v521 = vshrl.u32 %v520, 7
  %v522 = vsub.s32 0, %v521
  %v523 = vrot.slane %v506, %v522
  %v524 = vlaneseq
  %v525 = vshrl.u32 %v524, 7
  %v526 = vsub.s32 0, %v525
  %v527 = vrot.slane %v489, %v526
  %v528 = vlaneseq
  %v529 = vshrl.u32 %v528, 7
  %v530 = vsub.s32 0, %v529
  %v531 = vrot.slane %v503, %v530
  %v532 = vlaneseq
  %v533 = vshrl.u32 %v532, 7
  %v534 = vsub.s32 0, %v533
  %v535 = vrot.slane %v505, %v534
  %v536 = vlaneseq
  %v537 = vshrl.u32 %v536, 7
  %v538 = vsub.s32 0, %v537
  %v539 = vrot.slane %v507, %v538
  %v548 = vadd.f32 %v511, %v420
  %v549 = vadd.f32 %v511, %v425
  %v550 = vadd.f32 %v511, %v430
  %v551 = vadd.f32 %v511, %v435
  %v552 = vadd.f32 %v511, %v440
  %v553 = vadd.f32 %v511, %v445
  %v554 = vadd.f32 %v511, %v450
  %v555 = vadd.f32 %v511, %v455
  %v556 = vadd.f32 %v515, %v420
  %v557 = vadd.f32 %v515, %v425
  %v558 = vadd.f32 %v515, %v430
  %v559 = vadd.f32 %v515, %v435
  %v560 = vadd.f32 %v515, %v440
  %v561 = vadd.f32 %v515, %v445
  %v562 = vadd.f32 %v515, %v450
  %v563 = vadd.f32 %v515, %v455
  %v564 = vadd.f32 %v519, %v420
  %v565 = vadd.f32 %v519, %v425
  %v566 = vadd.f32 %v519, %v430
  %v567 = vadd.f32 %v519, %v435
  %v568 = vadd.f32 %v519, %v440
  %v569 = vadd.f32 %v519, %v445
  %v570 = vadd.f32 %v519, %v450
  %v571 = vadd.f32 %v519, %v455
  %v572 = vadd.f32 %v523, %v420
  %v573 = vadd.f32 %v523, %v425
  %v574 = vadd.f32 %v523, %v430
  %v575 = vadd.f32 %v523, %v435
  %v576 = vadd.f32 %v523, %v440
  %v577 = vadd.f32 %v523, %v445
  %v578 = vadd.f32 %v523, %v450
  %v579 = vadd.f32 %v523, %v455
  %v580 = vadd.f32 %v527, %v420
  %v581 = vadd.f32 %v527, %v425
  %v582 = vadd.f32 %v527, %v430
  %v583 = vadd.f32 %v527, %v435
  %v584 = vadd.f32 %v527, %v440
  %v585 = vadd.f32 %v527, %v445
  %v586 = vadd.f32 %v527, %v450
  %v587 = vadd.f32 %v527, %v455
  %v588 = vadd.f32 %v531, %v420
  %v589 = vadd.f32 %v531, %v425
  %v590 = vadd.f32 %v531, %v430
  %v591 = vadd.f32 %v531, %v435
  %v592 = vadd.f32 %v531, %v440
  %v593 = vadd.f32 %v531, %v445
  %v594 = vadd.f32 %v531, %v450
  %v595 = vadd.f32 %v531, %v455
  %v596 = vadd.f32 %v535, %v420
  %v597 = vadd.f32 %v535, %v425
  %v598 = vadd.f32 %v535, %v430
  %v599 = vadd.f32 %v535, %v435
  %v600 = vadd.f32 %v535, %v440
  %v601 = vadd.f32 %v535, %v445
  %v602 = vadd.f32 %v535, %v450
  %v603 = vadd.f32 %v535, %v455
  %v604 = vadd.f32 %v539, %v420
  %v605 = vadd.f32 %v539, %v425
  %v606 = vadd.f32 %v539, %v430
  %v607 = vadd.f32 %v539, %v435
  %v608 = vadd.f32 %v539, %v440
  %v609 = vadd.f32 %v539, %v445
  %v610 = vadd.f32 %v539, %v450
  %v611 = vadd.f32 %v539, %v455
  %v612 = vmax.f32 %v548, 0.0
  %v613 = vmax.f32 %v549, 0.0
  %v614 = vmax.f32 %v550, 0.0
  %v615 = vmax.f32 %v551, 0.0
  %v616 = vmax.f32 %v552, 0.0
  %v617 = vmax.f32 %v553, 0.0
  %v618 = vmax.f32 %v554, 0.0
  %v619 = vmax.f32 %v555, 0.0
  %v620 = vmax.f32 %v556, 0.0
  %v621 = vmax.f32 %v557, 0.0
  %v622 = vmax.f32 %v558, 0.0
  %v623 = vmax.f32 %v559, 0.0
  %v624 = vmax.f32 %v560, 0.0
  %v625 = vmax.f32 %v561, 0.0
  %v626 = vmax.f32 %v562, 0.0
  %v627 = vmax.f32 %v563, 0.0
  %v628 = vmax.f32 %v564, 0.0
  %v629 = vmax.f32 %v565, 0.0
  %v630 = vmax.f32 %v566, 0.0
  %v631 = vmax.f32 %v567, 0.0
  %v632 = vmax.f32 %v568, 0.0
  %v633 = vmax.f32 %v569, 0.0
  %v634 = vmax.f32 %v570, 0.0
  %v635 = vmax.f32 %v571, 0.0
  %v636 = vmax.f32 %v572, 0.0
  %v637 = vmax.f32 %v573, 0.0
  %v638 = vmax.f32 %v574, 0.0
  %v639 = vmax.f32 %v575, 0.0
  %v640 = vmax.f32 %v576, 0.0
  %v641 = vmax.f32 %v577, 0.0
  %v642 = vmax.f32 %v578, 0.0
  %v643 = vmax.f32 %v579, 0.0
  %v644 = vmax.f32 %v580, 0.0
  %v645 = vmax.f32 %v581, 0.0
  %v646 = vmax.f32 %v582, 0.0
  %v647 = vmax.f32 %v583, 0.0
  %v648 = vmax.f32 %v584, 0.0
  %v649 = vmax.f32 %v585, 0.0
  %v650 = vmax.f32 %v586, 0.0
  %v651 = vmax.f32 %v587, 0.0
  %v652 = vmax.f32 %v588, 0.0
  %v653 = vmax.f32 %v589, 0.0
  %v654 = vmax.f32 %v590, 0.0
  %v655 = vmax.f32 %v591, 0.0
  %v656 = vmax.f32 %v592, 0.0
  %v657 = vmax.f32 %v593, 0.0
  %v658 = vmax.f32 %v594, 0.0
  %v659 = vmax.f32 %v595, 0.0
  %v660 = vmax.f32 %v596, 0.0
  %v661 = vmax.f32 %v597, 0.0
  %v662 = vmax.f32 %v598, 0.0
  %v663 = vmax.f32 %v599, 0.0
  %v664 = vmax.f32 %v600, 0.0
  %v665 = vmax.f32 %v601, 0.0
  %v666 = vmax.f32 %v602, 0.0
  %v667 = vmax.f32 %v603, 0.0
  %v668 = vmax.f32 %v604, 0.0
  %v669 = vmax.f32 %v605, 0.0
  %v670 = vmax.f32 %v606, 0.0
  %v671 = vmax.f32 %v607, 0.0
  %v672 = vmax.f32 %v608, 0.0
  %v673 = vmax.f32 %v609, 0.0
  %v674 = vmax.f32 %v610, 0.0
  %v675 = vmax.f32 %v611, 0.0
  %v676 = vld [vmem:[%s10] sm:$0xff]
  %v677 = vld [vmem:[%s10 + $0x8] sm:$0xff]
  %v678 = vld [vmem:[%s10 + $0x10] sm:$0xff]
  %v679 = vld [vmem:[%s10 + $0x18] sm:$0xff]
  %v680 = vld [vmem:[%s10 + $0x20] sm:$0xff]
  %v681 = vld [vmem:[%s10 + $0x28] sm:$0xff]
  %v682 = vld [vmem:[%s10 + $0x30] sm:$0xff]
  %v683 = vld [vmem:[%s10 + $0x38] sm:$0xff]
  %v684 = vld [vmem:[%s10 + $0x40] sm:$0xff]
  %v685 = vld [vmem:[%s10 + $0x48] sm:$0xff]
  %v686 = vld [vmem:[%s10 + $0x50] sm:$0xff]
  %v687 = vld [vmem:[%s10 + $0x58] sm:$0xff]
  %v688 = vld [vmem:[%s10 + $0x60] sm:$0xff]
  %v689 = vld [vmem:[%s10 + $0x68] sm:$0xff]
  %v690 = vld [vmem:[%s10 + $0x70] sm:$0xff]
  %v691 = vld [vmem:[%s10 + $0x78] sm:$0xff]
  %v692 = vld [vmem:[%s11] sm:$0x1]
  %v694 = vlaneseq
  %v695 = vshrl.u32 %v694, 7
  %v696 = vsub.s32 0, %v695
  %v697 = vrot.slane %v692, %v696
  %699 = vmatprep.subr.mxu0 0.0
  %700 = vmatpush1.msra.mxu0 %v676
  %701 = vmatprep.subr.mxu0 0.0
  %702 = vmatpush1.msra.mxu0 %v677
  %703 = vmatprep.subr.mxu0 0.0
  %704 = vmatpush1.msra.mxu0 %v678
  %705 = vmatprep.subr.mxu0 0.0
  %706 = vmatpush1.msra.mxu0 %v679
  %707 = vmatprep.subr.mxu0 0.0
  %708 = vmatpush1.msra.mxu0 %v680
  %709 = vmatprep.subr.mxu0 0.0
  %710 = vmatpush1.msra.mxu0 %v681
  %711 = vmatprep.subr.mxu0 0.0
  %712 = vmatpush1.msra.mxu0 %v682
  %713 = vmatprep.subr.mxu0 0.0
  %714 = vmatpush1.msra.mxu0 %v683
  %715 = vmatprep.subr.mxu0 0.0
  %716 = vmatpush1.msra.mxu0 %v684
  %717 = vmatprep.subr.mxu0 0.0
  %718 = vmatpush1.msra.mxu0 %v685
  %719 = vmatprep.subr.mxu0 0.0
  %720 = vmatpush1.msra.mxu0 %v686
  %721 = vmatprep.subr.mxu0 0.0
  %722 = vmatpush1.msra.mxu0 %v687
  %723 = vmatprep.subr.mxu0 0.0
  %724 = vmatpush1.msra.mxu0 %v688
  %725 = vmatprep.subr.mxu0 0.0
  %726 = vmatpush1.msra.mxu0 %v689
  %727 = vmatprep.subr.mxu0 0.0
  %728 = vmatpush1.msra.mxu0 %v690
  %729 = vmatprep.subr.mxu0 0.0
  %730 = vmatpush1.msra.mxu0 %v691
  %731 = vmatprep.subr.mxu0 0.0
  %732 = vmatpush1.msra.mxu0 0.0
  %733 = vmatprep.subr.mxu0 0.0
  %734 = vmatpush1.msra.mxu0 0.0
  %735 = vmatprep.subr.mxu0 0.0
  %736 = vmatpush1.msra.mxu0 0.0
  %737 = vmatprep.subr.mxu0 0.0
  %738 = vmatpush1.msra.mxu0 0.0
  %739 = vmatprep.subr.mxu0 0.0
  %740 = vmatpush1.msra.mxu0 0.0
  %741 = vmatprep.subr.mxu0 0.0
  %742 = vmatpush1.msra.mxu0 0.0
  %743 = vmatprep.subr.mxu0 0.0
  %744 = vmatpush1.msra.mxu0 0.0
  %745 = vmatprep.subr.mxu0 0.0
  %746 = vmatpush1.msra.mxu0 0.0
  %747 = vmatprep.subr.mxu0 0.0
  %748 = vmatpush1.msra.mxu0 0.0
  %749 = vmatprep.subr.mxu0 0.0
  %750 = vmatpush1.msra.mxu0 0.0
  %751 = vmatprep.subr.mxu0 0.0
  %752 = vmatpush1.msra.mxu0 0.0
  %753 = vmatprep.subr.mxu0 0.0
  %754 = vmatpush1.msra.mxu0 0.0
  %755 = vmatprep.subr.mxu0 0.0
  %756 = vmatpush1.msra.mxu0 0.0
  %757 = vmatprep.subr.mxu0 0.0
  %758 = vmatpush1.msra.mxu0 0.0
  %759 = vmatprep.subr.mxu0 0.0
  %760 = vmatpush1.msra.mxu0 0.0
  %761 = vmatprep.subr.mxu0 0.0
  %762 = vmatpush1.msra.mxu0 0.0
  %763 = vmatprep.mubr.f32.mxu0 0.0
  %764 = vmatmul.mubr.f32.gmra.mrb[0].mxu0 %v612
  %v765 = vpop.f32.mrb[0].mxu0
  %v766 = vadd.f32 %v697, %v765
  %v767 = vpop.f32.mrb[0].mxu0
  %768 = vmatprep.mubr.f32.mxu0 0.0
  %769 = vmatmul.mubr.f32.gmra.mrb[0].mxu0 %v613
  %v770 = vpop.f32.mrb[0].mxu0
  %v771 = vadd.f32 %v697, %v770
  %v772 = vpop.f32.mrb[0].mxu0
  %773 = vmatprep.mubr.f32.mxu0 0.0
  %774 = vmatmul.mubr.f32.gmra.mrb[0].mxu0 %v614
  %v775 = vpop.f32.mrb[0].mxu0
  %v776 = vadd.f32 %v697, %v775
  %v777 = vpop.f32.mrb[0].mxu0
  %778 = vmatprep.mubr.f32.mxu0 0.0
  %779 = vmatmul.mubr.f32.gmra.mrb[0].mxu0 %v615
  %v780 = vpop.f32.mrb[0].mxu0
  %v781 = vadd.f32 %v697, %v780
  %v782 = vpop.f32.mrb[0].mxu0
  %783 = vmatprep.mubr.f32.mxu0 0.0
  %784 = vmatmul.mubr.f32.gmra.mrb[0].mxu0 %v616
  %v785 = vpop.f32.mrb[0].mxu0
  %v786 = vadd.f32 %v697, %v785
  %v787 = vpop.f32.mrb[0].mxu0
  %788 = vmatprep.mubr.f32.mxu0 0.0
  %789 = vmatmul.mubr.f32.gmra.mrb[0].mxu0 %v617
  %v790 = vpop.f32.mrb[0].mxu0
  %v791 = vadd.f32 %v697, %v790
  %v792 = vpop.f32.mrb[0].mxu0
  %793 = vmatprep.mubr.f32.mxu0 0.0
  %794 = vmatmul.mubr.f32.gmra.mrb[0].mxu0 %v618
  %v795 = vpop.f32.mrb[0].mxu0
  %v796 = vadd.f32 %v697, %v795
  %v797 = vpop.f32.mrb[0].mxu0
  %798 = vmatprep.mubr.f32.mxu0 0.0
  %799 = vmatmul.mubr.f32.gmra.mrb[0].mxu0 %v619
  %v800 = vpop.f32.mrb[0].mxu0
  %v801 = vadd.f32 %v697, %v800
  %v802 = vpop.f32.mrb[0].mxu0
  %803 = vmatprep.mubr.f32.mxu0 0.0
  %804 = vmatmul.mubr.f32.gmra.mrb[0].mxu0 %v620
  %v805 = vpop.f32.mrb[0].mxu0
  %v806 = vadd.f32 %v697, %v805
  %v807 = vpop.f32.mrb[0].mxu0
  %808 = vmatprep.mubr.f32.mxu0 0.0
  %809 = vmatmul.mubr.f32.gmra.mrb[0].mxu0 %v621
  %v810 = vpop.f32.mrb[0].mxu0
  %v811 = vadd.f32 %v697, %v810
  %v812 = vpop.f32.mrb[0].mxu0
  %813 = vmatprep.mubr.f32.mxu0 0.0
  %814 = vmatmul.mubr.f32.gmra.mrb[0].mxu0 %v622
  %v815 = vpop.f32.mrb[0].mxu0
  %v816 = vadd.f32 %v697, %v815
  %v817 = vpop.f32.mrb[0].mxu0
  %818 = vmatprep.mubr.f32.mxu0 0.0
  %819 = vmatmul.mubr.f32.gmra.mrb[0].mxu0 %v623
  %v820 = vpop.f32.mrb[0].mxu0
  %v821 = vadd.f32 %v697, %v820
  %v822 = vpop.f32.mrb[0].mxu0
  %823 = vmatprep.mubr.f32.mxu0 0.0
  %824 = vmatmul.mubr.f32.gmra.mrb[0].mxu0 %v624
  %v825 = vpop.f32.mrb[0].mxu0
  %v826 = vadd.f32 %v697, %v825
  %v827 = vpop.f32.mrb[0].mxu0
  %828 = vmatprep.mubr.f32.mxu0 0.0
  %829 = vmatmul.mubr.f32.gmra.mrb[0].mxu0 %v625
  %v830 = vpop.f32.mrb[0].mxu0
  %v831 = vadd.f32 %v697, %v830
  %v832 = vpop.f32.mrb[0].mxu0
  %833 = vmatprep.mubr.f32.mxu0 0.0
  %834 = vmatmul.mubr.f32.gmra.mrb[0].mxu0 %v626
  %v835 = vpop.f32.mrb[0].mxu0
  %v836 = vadd.f32 %v697, %v835
  %v837 = vpop.f32.mrb[0].mxu0
  %838 = vmatprep.mubr.f32.mxu0 0.0
  %839 = vmatmul.mubr.f32.gmra.mrb[0].mxu0 %v627
  %v840 = vpop.f32.mrb[0].mxu0
  %v841 = vadd.f32 %v697, %v840
  %v842 = vpop.f32.mrb[0].mxu0
  %843 = vmatprep.mubr.f32.mxu0 0.0
  %844 = vmatmul.mubr.f32.gmra.mrb[0].mxu0 %v628
  %v845 = vpop.f32.mrb[0].mxu0
  %v846 = vadd.f32 %v697, %v845
  %v847 = vpop.f32.mrb[0].mxu0
  %848 = vmatprep.mubr.f32.mxu0 0.0
  %849 = vmatmul.mubr.f32.gmra.mrb[0].mxu0 %v629
  %v850 = vpop.f32.mrb[0].mxu0
  %v851 = vadd.f32 %v697, %v850
  %v852 = vpop.f32.mrb[0].mxu0
  %853 = vmatprep.mubr.f32.mxu0 0.0
  %854 = vmatmul.mubr.f32.gmra.mrb[0].mxu0 %v630
  %v855 = vpop.f32.mrb[0].mxu0
  %v856 = vadd.f32 %v697, %v855
  %v857 = vpop.f32.mrb[0].mxu0
  %858 = vmatprep.mubr.f32.mxu0 0.0
  %859 = vmatmul.mubr.f32.gmra.mrb[0].mxu0 %v631
  %v860 = vpop.f32.mrb[0].mxu0
  %v861 = vadd.f32 %v697, %v860
  %v862 = vpop.f32.mrb[0].mxu0
  %863 = vmatprep.mubr.f32.mxu0 0.0
  %864 = vmatmul.mubr.f32.gmra.mrb[0].mxu0 %v632
  %v865 = vpop.f32.mrb[0].mxu0
  %v866 = vadd.f32 %v697, %v865
  %v867 = vpop.f32.mrb[0].mxu0
  %868 = vmatprep.mubr.f32.mxu0 0.0
  %869 = vmatmul.mubr.f32.gmra.mrb[0].mxu0 %v633
  %v870 = vpop.f32.mrb[0].mxu0
  %v871 = vadd.f32 %v697, %v870
  %v872 = vpop.f32.mrb[0].mxu0
  %873 = vmatprep.mubr.f32.mxu0 0.0
  %874 = vmatmul.mubr.f32.gmra.mrb[0].mxu0 %v634
  %v875 = vpop.f32.mrb[0].mxu0
  %v876 = vadd.f32 %v697, %v875
  %v877 = vpop.f32.mrb[0].mxu0
  %878 = vmatprep.mubr.f32.mxu0 0.0
  %879 = vmatmul.mubr.f32.gmra.mrb[0].mxu0 %v635
  %v880 = vpop.f32.mrb[0].mxu0
  %v881 = vadd.f32 %v697, %v880
  %v882 = vpop.f32.mrb[0].mxu0
  %883 = vmatprep.mubr.f32.mxu0 0.0
  %884 = vmatmul.mubr.f32.gmra.mrb[0].mxu0 %v636
  %v885 = vpop.f32.mrb[0].mxu0
  %v886 = vadd.f32 %v697, %v885
  %v887 = vpop.f32.mrb[0].mxu0
  %888 = vmatprep.mubr.f32.mxu0 0.0
  %889 = vmatmul.mubr.f32.gmra.mrb[0].mxu0 %v637
  %v890 = vpop.f32.mrb[0].mxu0
  %v891 = vadd.f32 %v697, %v890
  %v892 = vpop.f32.mrb[0].mxu0
  %893 = vmatprep.mubr.f32.mxu0 0.0
  %894 = vmatmul.mubr.f32.gmra.mrb[0].mxu0 %v638
  %v895 = vpop.f32.mrb[0].mxu0
  %v896 = vadd.f32 %v697, %v895
  %v897 = vpop.f32.mrb[0].mxu0
  %898 = vmatprep.mubr.f32.mxu0 0.0
  %899 = vmatmul.mubr.f32.gmra.mrb[0].mxu0 %v639
  %v900 = vpop.f32.mrb[0].mxu0
  %v901 = vadd.f32 %v697, %v900
  %v902 = vpop.f32.mrb[0].mxu0
  %903 = vmatprep.mubr.f32.mxu0 0.0
  %904 = vmatmul.mubr.f32.gmra.mrb[0].mxu0 %v640
  %v905 = vpop.f32.mrb[0].mxu0
  %v906 = vadd.f32 %v697, %v905
  %v907 = vpop.f32.mrb[0].mxu0
  %908 = vmatprep.mubr.f32.mxu0 0.0
  %909 = vmatmul.mubr.f32.gmra.mrb[0].mxu0 %v641
  %v910 = vpop.f32.mrb[0].mxu0
  %v911 = vadd.f32 %v697, %v910
  %v912 = vpop.f32.mrb[0].mxu0
  %913 = vmatprep.mubr.f32.mxu0 0.0
  %914 = vmatmul.mubr.f32.gmra.mrb[0].mxu0 %v642
  %v915 = vpop.f32.mrb[0].mxu0
  %v916 = vadd.f32 %v697, %v915
  %v917 = vpop.f32.mrb[0].mxu0
  %918 = vmatprep.mubr.f32.mxu0 0.0
  %919 = vmatmul.mubr.f32.gmra.mrb[0].mxu0 %v643
  %v920 = vpop.f32.mrb[0].mxu0
  %v921 = vadd.f32 %v697, %v920
  %v922 = vpop.f32.mrb[0].mxu0
  %923 = vmatprep.mubr.f32.mxu0 0.0
  %924 = vmatmul.mubr.f32.gmra.mrb[0].mxu0 %v644
  %v925 = vpop.f32.mrb[0].mxu0
  %v926 = vadd.f32 %v697, %v925
  %v927 = vpop.f32.mrb[0].mxu0
  %928 = vmatprep.mubr.f32.mxu0 0.0
  %929 = vmatmul.mubr.f32.gmra.mrb[0].mxu0 %v645
  %v930 = vpop.f32.mrb[0].mxu0
  %v931 = vadd.f32 %v697, %v930
  %v932 = vpop.f32.mrb[0].mxu0
  %933 = vmatprep.mubr.f32.mxu0 0.0
  %934 = vmatmul.mubr.f32.gmra.mrb[0].mxu0 %v646
  %v935 = vpop.f32.mrb[0].mxu0
  %v936 = vadd.f32 %v697, %v935
  %v937 = vpop.f32.mrb[0].mxu0
  %938 = vmatprep.mubr.f32.mxu0 0.0
  %939 = vmatmul.mubr.f32.gmra.mrb[0].mxu0 %v647
  %v940 = vpop.f32.mrb[0].mxu0
  %v941 = vadd.f32 %v697, %v940
  %v942 = vpop.f32.mrb[0].mxu0
  %943 = vmatprep.mubr.f32.mxu0 0.0
  %944 = vmatmul.mubr.f32.gmra.mrb[0].mxu0 %v648
  %v945 = vpop.f32.mrb[0].mxu0
  %v946 = vadd.f32 %v697, %v945
  %v947 = vpop.f32.mrb[0].mxu0
  %948 = vmatprep.mubr.f32.mxu0 0.0
  %949 = vmatmul.mubr.f32.gmra.mrb[0].mxu0 %v649
  %v950 = vpop.f32.mrb[0].mxu0
  %v951 = vadd.f32 %v697, %v950
  %v952 = vpop.f32.mrb[0].mxu0
  %953 = vmatprep.mubr.f32.mxu0 0.0
  %954 = vmatmul.mubr.f32.gmra.mrb[0].mxu0 %v650
  %v955 = vpop.f32.mrb[0].mxu0
  %v956 = vadd.f32 %v697, %v955
  %v957 = vpop.f32.mrb[0].mxu0
  %958 = vmatprep.mubr.f32.mxu0 0.0
  %959 = vmatmul.mubr.f32.gmra.mrb[0].mxu0 %v651
  %v960 = vpop.f32.mrb[0].mxu0
  %v961 = vadd.f32 %v697, %v960
  %v962 = vpop.f32.mrb[0].mxu0
  %963 = vmatprep.mubr.f32.mxu0 0.0
  %964 = vmatmul.mubr.f32.gmra.mrb[0].mxu0 %v652
  %v965 = vpop.f32.mrb[0].mxu0
  %v966 = vadd.f32 %v697, %v965
  %v967 = vpop.f32.mrb[0].mxu0
  %968 = vmatprep.mubr.f32.mxu0 0.0
  %969 = vmatmul.mubr.f32.gmra.mrb[0].mxu0 %v653
  %v970 = vpop.f32.mrb[0].mxu0
  %v971 = vadd.f32 %v697, %v970
  %v972 = vpop.f32.mrb[0].mxu0
  %973 = vmatprep.mubr.f32.mxu0 0.0
  %974 = vmatmul.mubr.f32.gmra.mrb[0].mxu0 %v654
  %v975 = vpop.f32.mrb[0].mxu0
  %v976 = vadd.f32 %v697, %v975
  %v977 = vpop.f32.mrb[0].mxu0
  %978 = vmatprep.mubr.f32.mxu0 0.0
  %979 = vmatmul.mubr.f32.gmra.mrb[0].mxu0 %v655
  %v980 = vpop.f32.mrb[0].mxu0
  %v981 = vadd.f32 %v697, %v980
  %v982 = vpop.f32.mrb[0].mxu0
  %983 = vmatprep.mubr.f32.mxu0 0.0
  %984 = vmatmul.mubr.f32.gmra.mrb[0].mxu0 %v656
  %v985 = vpop.f32.mrb[0].mxu0
  %v986 = vadd.f32 %v697, %v985
  %v987 = vpop.f32.mrb[0].mxu0
  %988 = vmatprep.mubr.f32.mxu0 0.0
  %989 = vmatmul.mubr.f32.gmra.mrb[0].mxu0 %v657
  %v990 = vpop.f32.mrb[0].mxu0
  %v991 = vadd.f32 %v697, %v990
  %v992 = vpop.f32.mrb[0].mxu0
  %993 = vmatprep.mubr.f32.mxu0 0.0
  %994 = vmatmul.mubr.f32.gmra.mrb[0].mxu0 %v658
  %v995 = vpop.f32.mrb[0].mxu0
  %v996 = vadd.f32 %v697, %v995
  %v997 = vpop.f32.mrb[0].mxu0
  %998 = vmatprep.mubr.f32.mxu0 0.0
  %999 = vmatmul.mubr.f32.gmra.mrb[0].mxu0 %v659
  %v1000 = vpop.f32.mrb[0].mxu0
  %v1001 = vadd.f32 %v697, %v1000
  %v1002 = vpop.f32.mrb[0].mxu0
  %1003 = vmatprep.mubr.f32.mxu0 0.0
  %1004 = vmatmul.mubr.f32.gmra.mrb[0].mxu0 %v660
  %v1005 = vpop.f32.mrb[0].mxu0
  %v1006 = vadd.f32 %v697, %v1005
  %v1007 = vpop.f32.mrb[0].mxu0
  %1008 = vmatprep.mubr.f32.mxu0 0.0
  %1009 = vmatmul.mubr.f32.gmra.mrb[0].mxu0 %v661
  %v1010 = vpop.f32.mrb[0].mxu0
  %v1011 = vadd.f32 %v697, %v1010
  %v1012 = vpop.f32.mrb[0].mxu0
  %1013 = vmatprep.mubr.f32.mxu0 0.0
  %1014 = vmatmul.mubr.f32.gmra.mrb[0].mxu0 %v662
  %v1015 = vpop.f32.mrb[0].mxu0
  %v1016 = vadd.f32 %v697, %v1015
  %v1017 = vpop.f32.mrb[0].mxu0
  %1018 = vmatprep.mubr.f32.mxu0 0.0
  %1019 = vmatmul.mubr.f32.gmra.mrb[0].mxu0 %v663
  %v1020 = vpop.f32.mrb[0].mxu0
  %v1021 = vadd.f32 %v697, %v1020
  %v1022 = vpop.f32.mrb[0].mxu0
  %1023 = vmatprep.mubr.f32.mxu0 0.0
  %1024 = vmatmul.mubr.f32.gmra.mrb[0].mxu0 %v664
  %v1025 = vpop.f32.mrb[0].mxu0
  %v1026 = vadd.f32 %v697, %v1025
  %v1027 = vpop.f32.mrb[0].mxu0
  %1028 = vmatprep.mubr.f32.mxu0 0.0
  %1029 = vmatmul.mubr.f32.gmra.mrb[0].mxu0 %v665
  %v1030 = vpop.f32.mrb[0].mxu0
  %v1031 = vadd.f32 %v697, %v1030
  %v1032 = vpop.f32.mrb[0].mxu0
  %1033 = vmatprep.mubr.f32.mxu0 0.0
  %1034 = vmatmul.mubr.f32.gmra.mrb[0].mxu0 %v666
  %v1035 = vpop.f32.mrb[0].mxu0
  %v1036 = vadd.f32 %v697, %v1035
  %v1037 = vpop.f32.mrb[0].mxu0
  %1038 = vmatprep.mubr.f32.mxu0 0.0
  %1039 = vmatmul.mubr.f32.gmra.mrb[0].mxu0 %v667
  %v1040 = vpop.f32.mrb[0].mxu0
  %v1041 = vadd.f32 %v697, %v1040
  %v1042 = vpop.f32.mrb[0].mxu0
  %1043 = vmatprep.mubr.f32.mxu0 0.0
  %1044 = vmatmul.mubr.f32.gmra.mrb[0].mxu0 %v668
  %v1045 = vpop.f32.mrb[0].mxu0
  %v1046 = vadd.f32 %v697, %v1045
  %v1047 = vpop.f32.mrb[0].mxu0
  %1048 = vmatprep.mubr.f32.mxu0 0.0
  %1049 = vmatmul.mubr.f32.gmra.mrb[0].mxu0 %v669
  %v1050 = vpop.f32.mrb[0].mxu0
  %v1051 = vadd.f32 %v697, %v1050
  %v1052 = vpop.f32.mrb[0].mxu0
  %1053 = vmatprep.mubr.f32.mxu0 0.0
  %1054 = vmatmul.mubr.f32.gmra.mrb[0].mxu0 %v670
  %v1055 = vpop.f32.mrb[0].mxu0
  %v1056 = vadd.f32 %v697, %v1055
  %v1057 = vpop.f32.mrb[0].mxu0
  %1058 = vmatprep.mubr.f32.mxu0 0.0
  %1059 = vmatmul.mubr.f32.gmra.mrb[0].mxu0 %v671
  %v1060 = vpop.f32.mrb[0].mxu0
  %v1061 = vadd.f32 %v697, %v1060
  %v1062 = vpop.f32.mrb[0].mxu0
  %1063 = vmatprep.mubr.f32.mxu0 0.0
  %1064 = vmatmul.mubr.f32.gmra.mrb[0].mxu0 %v672
  %v1065 = vpop.f32.mrb[0].mxu0
  %v1066 = vadd.f32 %v697, %v1065
  %v1067 = vpop.f32.mrb[0].mxu0
  %1068 = vmatprep.mubr.f32.mxu0 0.0
  %1069 = vmatmul.mubr.f32.gmra.mrb[0].mxu0 %v673
  %v1070 = vpop.f32.mrb[0].mxu0
  %v1071 = vadd.f32 %v697, %v1070
  %v1072 = vpop.f32.mrb[0].mxu0
  %1073 = vmatprep.mubr.f32.mxu0 0.0
  %1074 = vmatmul.mubr.f32.gmra.mrb[0].mxu0 %v674
  %v1075 = vpop.f32.mrb[0].mxu0
  %v1076 = vadd.f32 %v697, %v1075
  %v1077 = vpop.f32.mrb[0].mxu0
  %1078 = vmatprep.mubr.f32.mxu0 0.0
  %1079 = vmatmul.mubr.f32.gmra.mrb[0].mxu0 %v675
  %v1080 = vpop.f32.mrb[0].mxu0
  %v1081 = vadd.f32 %v697, %v1080
  %v1082 = vpop.f32.mrb[0].mxu0
  %1083 = vdwg.mxu0
  %v1084 = vmax.f32 %v766, 0.0
  %v1085 = vmax.f32 %v771, 0.0
  %v1086 = vmax.f32 %v776, 0.0
  %v1087 = vmax.f32 %v781, 0.0
  %v1088 = vmax.f32 %v786, 0.0
  %v1089 = vmax.f32 %v791, 0.0
  %v1090 = vmax.f32 %v796, 0.0
  %v1091 = vmax.f32 %v801, 0.0
  %v1092 = vmax.f32 %v806, 0.0
  %v1093 = vmax.f32 %v811, 0.0
  %v1094 = vmax.f32 %v816, 0.0
  %v1095 = vmax.f32 %v821, 0.0
  %v1096 = vmax.f32 %v826, 0.0
  %v1097 = vmax.f32 %v831, 0.0
  %v1098 = vmax.f32 %v836, 0.0
  %v1099 = vmax.f32 %v841, 0.0
  %v1100 = vmax.f32 %v846, 0.0
  %v1101 = vmax.f32 %v851, 0.0
  %v1102 = vmax.f32 %v856, 0.0
  %v1103 = vmax.f32 %v861, 0.0
  %v1104 = vmax.f32 %v866, 0.0
  %v1105 = vmax.f32 %v871, 0.0
  %v1106 = vmax.f32 %v876, 0.0
  %v1107 = vmax.f32 %v881, 0.0
  %v1108 = vmax.f32 %v886, 0.0
  %v1109 = vmax.f32 %v891, 0.0
  %v1110 = vmax.f32 %v896, 0.0
  %v1111 = vmax.f32 %v901, 0.0
  %v1112 = vmax.f32 %v906, 0.0
  %v1113 = vmax.f32 %v911, 0.0
  %v1114 = vmax.f32 %v916, 0.0
  %v1115 = vmax.f32 %v921, 0.0
  %v1116 = vmax.f32 %v926, 0.0
  %v1117 = vmax.f32 %v931, 0.0
  %v1118 = vmax.f32 %v936, 0.0
  %v1119 = vmax.f32 %v941, 0.0
  %v1120 = vmax.f32 %v946, 0.0
  %v1121 = vmax.f32 %v951, 0.0
  %v1122 = vmax.f32 %v956, 0.0
  %v1123 = vmax.f32 %v961, 0.0
  %v1124 = vmax.f32 %v966, 0.0
  %v1125 = vmax.f32 %v971, 0.0
  %v1126 = vmax.f32 %v976, 0.0
  %v1127 = vmax.f32 %v981, 0.0
  %v1128 = vmax.f32 %v986, 0.0
  %v1129 = vmax.f32 %v991, 0.0
  %v1130 = vmax.f32 %v996, 0.0
  %v1131 = vmax.f32 %v1001, 0.0
  %v1132 = vmax.f32 %v1006, 0.0
  %v1133 = vmax.f32 %v1011, 0.0
  %v1134 = vmax.f32 %v1016, 0.0
  %v1135 = vmax.f32 %v1021, 0.0
  %v1136 = vmax.f32 %v1026, 0.0
  %v1137 = vmax.f32 %v1031, 0.0
  %v1138 = vmax.f32 %v1036, 0.0
  %v1139 = vmax.f32 %v1041, 0.0
  %v1140 = vmax.f32 %v1046, 0.0
  %v1141 = vmax.f32 %v1051, 0.0
  %v1142 = vmax.f32 %v1056, 0.0
  %v1143 = vmax.f32 %v1061, 0.0
  %v1144 = vmax.f32 %v1066, 0.0
  %v1145 = vmax.f32 %v1071, 0.0
  %v1146 = vmax.f32 %v1076, 0.0
  %v1147 = vmax.f32 %v1081, 0.0
  %v1148 = vld [vmem:[%s12] sm:$0xff]
  %v1149 = vld [vmem:[%s12 + $0x8] sm:$0xff]
  %v1150 = vld [vmem:[%s12 + $0x10] sm:$0xff]
  %v1151 = vld [vmem:[%s12 + $0x18] sm:$0xff]
  %v1152 = vld [vmem:[%s12 + $0x20] sm:$0xff]
  %v1153 = vld [vmem:[%s12 + $0x28] sm:$0xff]
  %v1154 = vld [vmem:[%s12 + $0x30] sm:$0xff]
  %v1155 = vld [vmem:[%s12 + $0x38] sm:$0xff]
  %v1156 = vld [vmem:[%s13] sm:$0x1]
  %v1158 = vlaneseq
  %v1159 = vshrl.u32 %v1158, 7
  %v1160 = vsub.s32 0, %v1159
  %v1161 = vrot.slane %v1156, %v1160
  %vm1163 = vcmask 523264
  %v1165 = vsel %vm1163, %v1084, 0
  %v1168 = vsel %vm1163, %v1085, 0
  %v1171 = vsel %vm1163, %v1086, 0
  %v1174 = vsel %vm1163, %v1087, 0
  %v1177 = vsel %vm1163, %v1088, 0
  %v1180 = vsel %vm1163, %v1089, 0
  %v1183 = vsel %vm1163, %v1090, 0
  %v1186 = vsel %vm1163, %v1091, 0
  %v1189 = vsel %vm1163, %v1092, 0
  %v1192 = vsel %vm1163, %v1093, 0
  %v1195 = vsel %vm1163, %v1094, 0
  %v1198 = vsel %vm1163, %v1095, 0
  %v1201 = vsel %vm1163, %v1096, 0
  %v1204 = vsel %vm1163, %v1097, 0
  %v1207 = vsel %vm1163, %v1098, 0
  %v1210 = vsel %vm1163, %v1099, 0
  %v1213 = vsel %vm1163, %v1100, 0
  %v1216 = vsel %vm1163, %v1101, 0
  %v1219 = vsel %vm1163, %v1102, 0
  %v1222 = vsel %vm1163, %v1103, 0
  %v1225 = vsel %vm1163, %v1104, 0
  %v1228 = vsel %vm1163, %v1105, 0
  %v1231 = vsel %vm1163, %v1106, 0
  %v1234 = vsel %vm1163, %v1107, 0
  %v1237 = vsel %vm1163, %v1108, 0
  %v1240 = vsel %vm1163, %v1109, 0
  %v1243 = vsel %vm1163, %v1110, 0
  %v1246 = vsel %vm1163, %v1111, 0
  %v1249 = vsel %vm1163, %v1112, 0
  %v1252 = vsel %vm1163, %v1113, 0
  %v1255 = vsel %vm1163, %v1114, 0
  %v1258 = vsel %vm1163, %v1115, 0
  %v1261 = vsel %vm1163, %v1116, 0
  %v1264 = vsel %vm1163, %v1117, 0
  %v1267 = vsel %vm1163, %v1118, 0
  %v1270 = vsel %vm1163, %v1119, 0
  %v1273 = vsel %vm1163, %v1120, 0
  %v1276 = vsel %vm1163, %v1121, 0
  %v1279 = vsel %vm1163, %v1122, 0
  %v1282 = vsel %vm1163, %v1123, 0
  %v1285 = vsel %vm1163, %v1124, 0
  %v1288 = vsel %vm1163, %v1125, 0
  %v1291 = vsel %vm1163, %v1126, 0
  %v1294 = vsel %vm1163, %v1127, 0
  %v1297 = vsel %vm1163, %v1128, 0
  %v1300 = vsel %vm1163, %v1129, 0
  %v1303 = vsel %vm1163, %v1130, 0
  %v1306 = vsel %vm1163, %v1131, 0
  %v1309 = vsel %vm1163, %v1132, 0
  %v1312 = vsel %vm1163, %v1133, 0
  %v1315 = vsel %vm1163, %v1134, 0
  %v1318 = vsel %vm1163, %v1135, 0
  %v1321 = vsel %vm1163, %v1136, 0
  %v1324 = vsel %vm1163, %v1137, 0
  %v1327 = vsel %vm1163, %v1138, 0
  %v1330 = vsel %vm1163, %v1139, 0
  %v1333 = vsel %vm1163, %v1140, 0
  %v1336 = vsel %vm1163, %v1141, 0
  %v1339 = vsel %vm1163, %v1142, 0
  %v1342 = vsel %vm1163, %v1143, 0
  %v1345 = vsel %vm1163, %v1144, 0
  %v1348 = vsel %vm1163, %v1145, 0
  %v1351 = vsel %vm1163, %v1146, 0
  %v1354 = vsel %vm1163, %v1147, 0
  %1356 = vmatprep.subr.mxu0 0.0
  %1357 = vmatpush1.msra.mxu0 %v1148
  %1358 = vmatprep.subr.mxu0 0.0
  %1359 = vmatpush1.msra.mxu0 %v1149
  %1360 = vmatprep.subr.mxu0 0.0
  %1361 = vmatpush1.msra.mxu0 %v1150
  %1362 = vmatprep.subr.mxu0 0.0
  %1363 = vmatpush1.msra.mxu0 %v1151
  %1364 = vmatprep.subr.mxu0 0.0
  %1365 = vmatpush1.msra.mxu0 %v1152
  %1366 = vmatprep.subr.mxu0 0.0
  %1367 = vmatpush1.msra.mxu0 %v1153
  %1368 = vmatprep.subr.mxu0 0.0
  %1369 = vmatpush1.msra.mxu0 %v1154
  %1370 = vmatprep.subr.mxu0 0.0
  %1371 = vmatpush1.msra.mxu0 %v1155
  %1372 = vmatprep.subr.mxu0 0.0
  %1373 = vmatpush1.msra.mxu0 0.0
  %1374 = vmatprep.subr.mxu0 0.0
  %1375 = vmatpush1.msra.mxu0 0.0
  %1376 = vmatprep.subr.mxu0 0.0
  %1377 = vmatpush1.msra.mxu0 0.0
  %1378 = vmatprep.subr.mxu0 0.0
  %1379 = vmatpush1.msra.mxu0 0.0
  %1380 = vmatprep.subr.mxu0 0.0
  %1381 = vmatpush1.msra.mxu0 0.0
  %1382 = vmatprep.subr.mxu0 0.0
  %1383 = vmatpush1.msra.mxu0 0.0
  %1384 = vmatprep.subr.mxu0 0.0
  %1385 = vmatpush1.msra.mxu0 0.0
  %1386 = vmatprep.subr.mxu0 0.0
  %1387 = vmatpush1.msra.mxu0 0.0
  %1388 = vmatprep.subr.mxu0 0.0
  %1389 = vmatpush1.msra.mxu0 0.0
  %1390 = vmatprep.subr.mxu0 0.0
  %1391 = vmatpush1.msra.mxu0 0.0
  %1392 = vmatprep.subr.mxu0 0.0
  %1393 = vmatpush1.msra.mxu0 0.0
  %1394 = vmatprep.subr.mxu0 0.0
  %1395 = vmatpush1.msra.mxu0 0.0
  %1396 = vmatprep.subr.mxu0 0.0
  %1397 = vmatpush1.msra.mxu0 0.0
  %1398 = vmatprep.subr.mxu0 0.0
  %1399 = vmatpush1.msra.mxu0 0.0
  %1400 = vmatprep.subr.mxu0 0.0
  %1401 = vmatpush1.msra.mxu0 0.0
  %1402 = vmatprep.subr.mxu0 0.0
  %1403 = vmatpush1.msra.mxu0 0.0
  %1404 = vmatprep.subr.mxu0 0.0
  %1405 = vmatpush1.msra.mxu0 0.0
  %1406 = vmatprep.subr.mxu0 0.0
  %1407 = vmatpush1.msra.mxu0 0.0
  %1408 = vmatprep.subr.mxu0 0.0
  %1409 = vmatpush1.msra.mxu0 0.0
  %1410 = vmatprep.subr.mxu0 0.0
  %1411 = vmatpush1.msra.mxu0 0.0
  %1412 = vmatprep.subr.mxu0 0.0
  %1413 = vmatpush1.msra.mxu0 0.0
  %1414 = vmatprep.subr.mxu0 0.0
  %1415 = vmatpush1.msra.mxu0 0.0
  %1416 = vmatprep.subr.mxu0 0.0
  %1417 = vmatpush1.msra.mxu0 0.0
  %1418 = vmatprep.subr.mxu0 0.0
  %1419 = vmatpush1.msra.mxu0 0.0
  %1420 = vmatprep.mubr.f32.mxu0 0.0
  %1421 = vmatmul.mubr.f32.gmra.mrb[0].mxu0 %v1165
  %v1422 = vpop.f32.mrb[0].mxu0
  %v1423 = vadd.f32 %v1161, %v1422
  %v1424 = vpop.f32.mrb[0].mxu0
  %1425 = vmatprep.mubr.f32.mxu0 0.0
  %1426 = vmatmul.mubr.f32.gmra.mrb[0].mxu0 %v1168
  %v1427 = vpop.f32.mrb[0].mxu0
  %v1428 = vadd.f32 %v1161, %v1427
  %v1429 = vpop.f32.mrb[0].mxu0
  %1430 = vmatprep.mubr.f32.mxu0 0.0
  %1431 = vmatmul.mubr.f32.gmra.mrb[0].mxu0 %v1171
  %v1432 = vpop.f32.mrb[0].mxu0
  %v1433 = vadd.f32 %v1161, %v1432
  %v1434 = vpop.f32.mrb[0].mxu0
  %1435 = vmatprep.mubr.f32.mxu0 0.0
  %1436 = vmatmul.mubr.f32.gmra.mrb[0].mxu0 %v1174
  %v1437 = vpop.f32.mrb[0].mxu0
  %v1438 = vadd.f32 %v1161, %v1437
  %v1439 = vpop.f32.mrb[0].mxu0
  %1440 = vmatprep.mubr.f32.mxu0 0.0
  %1441 = vmatmul.mubr.f32.gmra.mrb[0].mxu0 %v1177
  %v1442 = vpop.f32.mrb[0].mxu0
  %v1443 = vadd.f32 %v1161, %v1442
  %v1444 = vpop.f32.mrb[0].mxu0
  %1445 = vmatprep.mubr.f32.mxu0 0.0
  %1446 = vmatmul.mubr.f32.gmra.mrb[0].mxu0 %v1180
  %v1447 = vpop.f32.mrb[0].mxu0
  %v1448 = vadd.f32 %v1161, %v1447
  %v1449 = vpop.f32.mrb[0].mxu0
  %1450 = vmatprep.mubr.f32.mxu0 0.0
  %1451 = vmatmul.mubr.f32.gmra.mrb[0].mxu0 %v1183
  %v1452 = vpop.f32.mrb[0].mxu0
  %v1453 = vadd.f32 %v1161, %v1452
  %v1454 = vpop.f32.mrb[0].mxu0
  %1455 = vmatprep.mubr.f32.mxu0 0.0
  %1456 = vmatmul.mubr.f32.gmra.mrb[0].mxu0 %v1186
  %v1457 = vpop.f32.mrb[0].mxu0
  %v1458 = vadd.f32 %v1161, %v1457
  %v1459 = vpop.f32.mrb[0].mxu0
  %1460 = vmatprep.mubr.f32.mxu0 0.0
  %1461 = vmatmul.mubr.f32.gmra.mrb[0].mxu0 %v1189
  %v1462 = vpop.f32.mrb[0].mxu0
  %v1463 = vadd.f32 %v1161, %v1462
  %v1464 = vpop.f32.mrb[0].mxu0
  %1465 = vmatprep.mubr.f32.mxu0 0.0
  %1466 = vmatmul.mubr.f32.gmra.mrb[0].mxu0 %v1192
  %v1467 = vpop.f32.mrb[0].mxu0
  %v1468 = vadd.f32 %v1161, %v1467
  %v1469 = vpop.f32.mrb[0].mxu0
  %1470 = vmatprep.mubr.f32.mxu0 0.0
  %1471 = vmatmul.mubr.f32.gmra.mrb[0].mxu0 %v1195
  %v1472 = vpop.f32.mrb[0].mxu0
  %v1473 = vadd.f32 %v1161, %v1472
  %v1474 = vpop.f32.mrb[0].mxu0
  %1475 = vmatprep.mubr.f32.mxu0 0.0
  %1476 = vmatmul.mubr.f32.gmra.mrb[0].mxu0 %v1198
  %v1477 = vpop.f32.mrb[0].mxu0
  %v1478 = vadd.f32 %v1161, %v1477
  %v1479 = vpop.f32.mrb[0].mxu0
  %1480 = vmatprep.mubr.f32.mxu0 0.0
  %1481 = vmatmul.mubr.f32.gmra.mrb[0].mxu0 %v1201
  %v1482 = vpop.f32.mrb[0].mxu0
  %v1483 = vadd.f32 %v1161, %v1482
  %v1484 = vpop.f32.mrb[0].mxu0
  %1485 = vmatprep.mubr.f32.mxu0 0.0
  %1486 = vmatmul.mubr.f32.gmra.mrb[0].mxu0 %v1204
  %v1487 = vpop.f32.mrb[0].mxu0
  %v1488 = vadd.f32 %v1161, %v1487
  %v1489 = vpop.f32.mrb[0].mxu0
  %1490 = vmatprep.mubr.f32.mxu0 0.0
  %1491 = vmatmul.mubr.f32.gmra.mrb[0].mxu0 %v1207
  %v1492 = vpop.f32.mrb[0].mxu0
  %v1493 = vadd.f32 %v1161, %v1492
  %v1494 = vpop.f32.mrb[0].mxu0
  %1495 = vmatprep.mubr.f32.mxu0 0.0
  %1496 = vmatmul.mubr.f32.gmra.mrb[0].mxu0 %v1210
  %v1497 = vpop.f32.mrb[0].mxu0
  %v1498 = vadd.f32 %v1161, %v1497
  %v1499 = vpop.f32.mrb[0].mxu0
  %1500 = vmatprep.mubr.f32.mxu0 0.0
  %1501 = vmatmul.mubr.f32.gmra.mrb[0].mxu0 %v1213
  %v1502 = vpop.f32.mrb[0].mxu0
  %v1503 = vadd.f32 %v1161, %v1502
  %v1504 = vpop.f32.mrb[0].mxu0
  %1505 = vmatprep.mubr.f32.mxu0 0.0
  %1506 = vmatmul.mubr.f32.gmra.mrb[0].mxu0 %v1216
  %v1507 = vpop.f32.mrb[0].mxu0
  %v1508 = vadd.f32 %v1161, %v1507
  %v1509 = vpop.f32.mrb[0].mxu0
  %1510 = vmatprep.mubr.f32.mxu0 0.0
  %1511 = vmatmul.mubr.f32.gmra.mrb[0].mxu0 %v1219
  %v1512 = vpop.f32.mrb[0].mxu0
  %v1513 = vadd.f32 %v1161, %v1512
  %v1514 = vpop.f32.mrb[0].mxu0
  %1515 = vmatprep.mubr.f32.mxu0 0.0
  %1516 = vmatmul.mubr.f32.gmra.mrb[0].mxu0 %v1222
  %v1517 = vpop.f32.mrb[0].mxu0
  %v1518 = vadd.f32 %v1161, %v1517
  %v1519 = vpop.f32.mrb[0].mxu0
  %1520 = vmatprep.mubr.f32.mxu0 0.0
  %1521 = vmatmul.mubr.f32.gmra.mrb[0].mxu0 %v1225
  %v1522 = vpop.f32.mrb[0].mxu0
  %v1523 = vadd.f32 %v1161, %v1522
  %v1524 = vpop.f32.mrb[0].mxu0
  %1525 = vmatprep.mubr.f32.mxu0 0.0
  %1526 = vmatmul.mubr.f32.gmra.mrb[0].mxu0 %v1228
  %v1527 = vpop.f32.mrb[0].mxu0
  %v1528 = vadd.f32 %v1161, %v1527
  %v1529 = vpop.f32.mrb[0].mxu0
  %1530 = vmatprep.mubr.f32.mxu0 0.0
  %1531 = vmatmul.mubr.f32.gmra.mrb[0].mxu0 %v1231
  %v1532 = vpop.f32.mrb[0].mxu0
  %v1533 = vadd.f32 %v1161, %v1532
  %v1534 = vpop.f32.mrb[0].mxu0
  %1535 = vmatprep.mubr.f32.mxu0 0.0
  %1536 = vmatmul.mubr.f32.gmra.mrb[0].mxu0 %v1234
  %v1537 = vpop.f32.mrb[0].mxu0
  %v1538 = vadd.f32 %v1161, %v1537
  %v1539 = vpop.f32.mrb[0].mxu0
  %1540 = vmatprep.mubr.f32.mxu0 0.0
  %1541 = vmatmul.mubr.f32.gmra.mrb[0].mxu0 %v1237
  %v1542 = vpop.f32.mrb[0].mxu0
  %v1543 = vadd.f32 %v1161, %v1542
  %v1544 = vpop.f32.mrb[0].mxu0
  %1545 = vmatprep.mubr.f32.mxu0 0.0
  %1546 = vmatmul.mubr.f32.gmra.mrb[0].mxu0 %v1240
  %v1547 = vpop.f32.mrb[0].mxu0
  %v1548 = vadd.f32 %v1161, %v1547
  %v1549 = vpop.f32.mrb[0].mxu0
  %1550 = vmatprep.mubr.f32.mxu0 0.0
  %1551 = vmatmul.mubr.f32.gmra.mrb[0].mxu0 %v1243
  %v1552 = vpop.f32.mrb[0].mxu0
  %v1553 = vadd.f32 %v1161, %v1552
  %v1554 = vpop.f32.mrb[0].mxu0
  %1555 = vmatprep.mubr.f32.mxu0 0.0
  %1556 = vmatmul.mubr.f32.gmra.mrb[0].mxu0 %v1246
  %v1557 = vpop.f32.mrb[0].mxu0
  %v1558 = vadd.f32 %v1161, %v1557
  %v1559 = vpop.f32.mrb[0].mxu0
  %1560 = vmatprep.mubr.f32.mxu0 0.0
  %1561 = vmatmul.mubr.f32.gmra.mrb[0].mxu0 %v1249
  %v1562 = vpop.f32.mrb[0].mxu0
  %v1563 = vadd.f32 %v1161, %v1562
  %v1564 = vpop.f32.mrb[0].mxu0
  %1565 = vmatprep.mubr.f32.mxu0 0.0
  %1566 = vmatmul.mubr.f32.gmra.mrb[0].mxu0 %v1252
  %v1567 = vpop.f32.mrb[0].mxu0
  %v1568 = vadd.f32 %v1161, %v1567
  %v1569 = vpop.f32.mrb[0].mxu0
  %1570 = vmatprep.mubr.f32.mxu0 0.0
  %1571 = vmatmul.mubr.f32.gmra.mrb[0].mxu0 %v1255
  %v1572 = vpop.f32.mrb[0].mxu0
  %v1573 = vadd.f32 %v1161, %v1572
  %v1574 = vpop.f32.mrb[0].mxu0
  %1575 = vmatprep.mubr.f32.mxu0 0.0
  %1576 = vmatmul.mubr.f32.gmra.mrb[0].mxu0 %v1258
  %v1577 = vpop.f32.mrb[0].mxu0
  %v1578 = vadd.f32 %v1161, %v1577
  %v1579 = vpop.f32.mrb[0].mxu0
  %1580 = vmatprep.mubr.f32.mxu0 0.0
  %1581 = vmatmul.mubr.f32.gmra.mrb[0].mxu0 %v1261
  %v1582 = vpop.f32.mrb[0].mxu0
  %v1583 = vadd.f32 %v1161, %v1582
  %v1584 = vpop.f32.mrb[0].mxu0
  %1585 = vmatprep.mubr.f32.mxu0 0.0
  %1586 = vmatmul.mubr.f32.gmra.mrb[0].mxu0 %v1264
  %v1587 = vpop.f32.mrb[0].mxu0
  %v1588 = vadd.f32 %v1161, %v1587
  %v1589 = vpop.f32.mrb[0].mxu0
  %1590 = vmatprep.mubr.f32.mxu0 0.0
  %1591 = vmatmul.mubr.f32.gmra.mrb[0].mxu0 %v1267
  %v1592 = vpop.f32.mrb[0].mxu0
  %v1593 = vadd.f32 %v1161, %v1592
  %v1594 = vpop.f32.mrb[0].mxu0
  %1595 = vmatprep.mubr.f32.mxu0 0.0
  %1596 = vmatmul.mubr.f32.gmra.mrb[0].mxu0 %v1270
  %v1597 = vpop.f32.mrb[0].mxu0
  %v1598 = vadd.f32 %v1161, %v1597
  %v1599 = vpop.f32.mrb[0].mxu0
  %1600 = vmatprep.mubr.f32.mxu0 0.0
  %1601 = vmatmul.mubr.f32.gmra.mrb[0].mxu0 %v1273
  %v1602 = vpop.f32.mrb[0].mxu0
  %v1603 = vadd.f32 %v1161, %v1602
  %v1604 = vpop.f32.mrb[0].mxu0
  %1605 = vmatprep.mubr.f32.mxu0 0.0
  %1606 = vmatmul.mubr.f32.gmra.mrb[0].mxu0 %v1276
  %v1607 = vpop.f32.mrb[0].mxu0
  %v1608 = vadd.f32 %v1161, %v1607
  %v1609 = vpop.f32.mrb[0].mxu0
  %1610 = vmatprep.mubr.f32.mxu0 0.0
  %1611 = vmatmul.mubr.f32.gmra.mrb[0].mxu0 %v1279
  %v1612 = vpop.f32.mrb[0].mxu0
  %v1613 = vadd.f32 %v1161, %v1612
  %v1614 = vpop.f32.mrb[0].mxu0
  %1615 = vmatprep.mubr.f32.mxu0 0.0
  %1616 = vmatmul.mubr.f32.gmra.mrb[0].mxu0 %v1282
  %v1617 = vpop.f32.mrb[0].mxu0
  %v1618 = vadd.f32 %v1161, %v1617
  %v1619 = vpop.f32.mrb[0].mxu0
  %1620 = vmatprep.mubr.f32.mxu0 0.0
  %1621 = vmatmul.mubr.f32.gmra.mrb[0].mxu0 %v1285
  %v1622 = vpop.f32.mrb[0].mxu0
  %v1623 = vadd.f32 %v1161, %v1622
  %v1624 = vpop.f32.mrb[0].mxu0
  %1625 = vmatprep.mubr.f32.mxu0 0.0
  %1626 = vmatmul.mubr.f32.gmra.mrb[0].mxu0 %v1288
  %v1627 = vpop.f32.mrb[0].mxu0
  %v1628 = vadd.f32 %v1161, %v1627
  %v1629 = vpop.f32.mrb[0].mxu0
  %1630 = vmatprep.mubr.f32.mxu0 0.0
  %1631 = vmatmul.mubr.f32.gmra.mrb[0].mxu0 %v1291
  %v1632 = vpop.f32.mrb[0].mxu0
  %v1633 = vadd.f32 %v1161, %v1632
  %v1634 = vpop.f32.mrb[0].mxu0
  %1635 = vmatprep.mubr.f32.mxu0 0.0
  %1636 = vmatmul.mubr.f32.gmra.mrb[0].mxu0 %v1294
  %v1637 = vpop.f32.mrb[0].mxu0
  %v1638 = vadd.f32 %v1161, %v1637
  %v1639 = vpop.f32.mrb[0].mxu0
  %1640 = vmatprep.mubr.f32.mxu0 0.0
  %1641 = vmatmul.mubr.f32.gmra.mrb[0].mxu0 %v1297
  %v1642 = vpop.f32.mrb[0].mxu0
  %v1643 = vadd.f32 %v1161, %v1642
  %v1644 = vpop.f32.mrb[0].mxu0
  %1645 = vmatprep.mubr.f32.mxu0 0.0
  %1646 = vmatmul.mubr.f32.gmra.mrb[0].mxu0 %v1300
  %v1647 = vpop.f32.mrb[0].mxu0
  %v1648 = vadd.f32 %v1161, %v1647
  %v1649 = vpop.f32.mrb[0].mxu0
  %1650 = vmatprep.mubr.f32.mxu0 0.0
  %1651 = vmatmul.mubr.f32.gmra.mrb[0].mxu0 %v1303
  %v1652 = vpop.f32.mrb[0].mxu0
  %v1653 = vadd.f32 %v1161, %v1652
  %v1654 = vpop.f32.mrb[0].mxu0
  %1655 = vmatprep.mubr.f32.mxu0 0.0
  %1656 = vmatmul.mubr.f32.gmra.mrb[0].mxu0 %v1306
  %v1657 = vpop.f32.mrb[0].mxu0
  %v1658 = vadd.f32 %v1161, %v1657
  %v1659 = vpop.f32.mrb[0].mxu0
  %1660 = vmatprep.mubr.f32.mxu0 0.0
  %1661 = vmatmul.mubr.f32.gmra.mrb[0].mxu0 %v1309
  %v1662 = vpop.f32.mrb[0].mxu0
  %v1663 = vadd.f32 %v1161, %v1662
  %v1664 = vpop.f32.mrb[0].mxu0
  %1665 = vmatprep.mubr.f32.mxu0 0.0
  %1666 = vmatmul.mubr.f32.gmra.mrb[0].mxu0 %v1312
  %v1667 = vpop.f32.mrb[0].mxu0
  %v1668 = vadd.f32 %v1161, %v1667
  %v1669 = vpop.f32.mrb[0].mxu0
  %1670 = vmatprep.mubr.f32.mxu0 0.0
  %1671 = vmatmul.mubr.f32.gmra.mrb[0].mxu0 %v1315
  %v1672 = vpop.f32.mrb[0].mxu0
  %v1673 = vadd.f32 %v1161, %v1672
  %v1674 = vpop.f32.mrb[0].mxu0
  %1675 = vmatprep.mubr.f32.mxu0 0.0
  %1676 = vmatmul.mubr.f32.gmra.mrb[0].mxu0 %v1318
  %v1677 = vpop.f32.mrb[0].mxu0
  %v1678 = vadd.f32 %v1161, %v1677
  %v1679 = vpop.f32.mrb[0].mxu0
  %1680 = vmatprep.mubr.f32.mxu0 0.0
  %1681 = vmatmul.mubr.f32.gmra.mrb[0].mxu0 %v1321
  %v1682 = vpop.f32.mrb[0].mxu0
  %v1683 = vadd.f32 %v1161, %v1682
  %v1684 = vpop.f32.mrb[0].mxu0
  %1685 = vmatprep.mubr.f32.mxu0 0.0
  %1686 = vmatmul.mubr.f32.gmra.mrb[0].mxu0 %v1324
  %v1687 = vpop.f32.mrb[0].mxu0
  %v1688 = vadd.f32 %v1161, %v1687
  %v1689 = vpop.f32.mrb[0].mxu0
  %1690 = vmatprep.mubr.f32.mxu0 0.0
  %1691 = vmatmul.mubr.f32.gmra.mrb[0].mxu0 %v1327
  %v1692 = vpop.f32.mrb[0].mxu0
  %v1693 = vadd.f32 %v1161, %v1692
  %v1694 = vpop.f32.mrb[0].mxu0
  %1695 = vmatprep.mubr.f32.mxu0 0.0
  %1696 = vmatmul.mubr.f32.gmra.mrb[0].mxu0 %v1330
  %v1697 = vpop.f32.mrb[0].mxu0
  %v1698 = vadd.f32 %v1161, %v1697
  %v1699 = vpop.f32.mrb[0].mxu0
  %1700 = vmatprep.mubr.f32.mxu0 0.0
  %1701 = vmatmul.mubr.f32.gmra.mrb[0].mxu0 %v1333
  %v1702 = vpop.f32.mrb[0].mxu0
  %v1703 = vadd.f32 %v1161, %v1702
  %v1704 = vpop.f32.mrb[0].mxu0
  %1705 = vmatprep.mubr.f32.mxu0 0.0
  %1706 = vmatmul.mubr.f32.gmra.mrb[0].mxu0 %v1336
  %v1707 = vpop.f32.mrb[0].mxu0
  %v1708 = vadd.f32 %v1161, %v1707
  %v1709 = vpop.f32.mrb[0].mxu0
  %1710 = vmatprep.mubr.f32.mxu0 0.0
  %1711 = vmatmul.mubr.f32.gmra.mrb[0].mxu0 %v1339
  %v1712 = vpop.f32.mrb[0].mxu0
  %v1713 = vadd.f32 %v1161, %v1712
  %v1714 = vpop.f32.mrb[0].mxu0
  %1715 = vmatprep.mubr.f32.mxu0 0.0
  %1716 = vmatmul.mubr.f32.gmra.mrb[0].mxu0 %v1342
  %v1717 = vpop.f32.mrb[0].mxu0
  %v1718 = vadd.f32 %v1161, %v1717
  %v1719 = vpop.f32.mrb[0].mxu0
  %1720 = vmatprep.mubr.f32.mxu0 0.0
  %1721 = vmatmul.mubr.f32.gmra.mrb[0].mxu0 %v1345
  %v1722 = vpop.f32.mrb[0].mxu0
  %v1723 = vadd.f32 %v1161, %v1722
  %v1724 = vpop.f32.mrb[0].mxu0
  %1725 = vmatprep.mubr.f32.mxu0 0.0
  %1726 = vmatmul.mubr.f32.gmra.mrb[0].mxu0 %v1348
  %v1727 = vpop.f32.mrb[0].mxu0
  %v1728 = vadd.f32 %v1161, %v1727
  %v1729 = vpop.f32.mrb[0].mxu0
  %1730 = vmatprep.mubr.f32.mxu0 0.0
  %1731 = vmatmul.mubr.f32.gmra.mrb[0].mxu0 %v1351
  %v1732 = vpop.f32.mrb[0].mxu0
  %v1733 = vadd.f32 %v1161, %v1732
  %v1734 = vpop.f32.mrb[0].mxu0
  %1735 = vmatprep.mubr.f32.mxu0 0.0
  %1736 = vmatmul.mubr.f32.gmra.mrb[0].mxu0 %v1354
  %v1737 = vpop.f32.mrb[0].mxu0
  %v1738 = vadd.f32 %v1161, %v1737
  %v1739 = vpop.f32.mrb[0].mxu0
  %1740 = vdwg.mxu0
  %s1741 = sld [smem:[#allocation2]]
  %v1742 = vstv %s1741
  %v1743 = vmul.f32 %v1423, %v1742
  %v1744 = vmul.f32 %v1428, %v1742
  %v1745 = vmul.f32 %v1433, %v1742
  %v1746 = vmul.f32 %v1438, %v1742
  %v1747 = vmul.f32 %v1443, %v1742
  %v1748 = vmul.f32 %v1448, %v1742
  %v1749 = vmul.f32 %v1453, %v1742
  %v1750 = vmul.f32 %v1458, %v1742
  %v1751 = vmul.f32 %v1463, %v1742
  %v1752 = vmul.f32 %v1468, %v1742
  %v1753 = vmul.f32 %v1473, %v1742
  %v1754 = vmul.f32 %v1478, %v1742
  %v1755 = vmul.f32 %v1483, %v1742
  %v1756 = vmul.f32 %v1488, %v1742
  %v1757 = vmul.f32 %v1493, %v1742
  %v1758 = vmul.f32 %v1498, %v1742
  %v1759 = vmul.f32 %v1503, %v1742
  %v1760 = vmul.f32 %v1508, %v1742
  %v1761 = vmul.f32 %v1513, %v1742
  %v1762 = vmul.f32 %v1518, %v1742
  %v1763 = vmul.f32 %v1523, %v1742
  %v1764 = vmul.f32 %v1528, %v1742
  %v1765 = vmul.f32 %v1533, %v1742
  %v1766 = vmul.f32 %v1538, %v1742
  %v1767 = vmul.f32 %v1543, %v1742
  %v1768 = vmul.f32 %v1548, %v1742
  %v1769 = vmul.f32 %v1553, %v1742
  %v1770 = vmul.f32 %v1558, %v1742
  %v1771 = vmul.f32 %v1563, %v1742
  %v1772 = vmul.f32 %v1568, %v1742
  %v1773 = vmul.f32 %v1573, %v1742
  %v1774 = vmul.f32 %v1578, %v1742
  %v1775 = vmul.f32 %v1583, %v1742
  %v1776 = vmul.f32 %v1588, %v1742
  %v1777 = vmul.f32 %v1593, %v1742
  %v1778 = vmul.f32 %v1598, %v1742
  %v1779 = vmul.f32 %v1603, %v1742
  %v1780 = vmul.f32 %v1608, %v1742
  %v1781 = vmul.f32 %v1613, %v1742
  %v1782 = vmul.f32 %v1618, %v1742
  %v1783 = vmul.f32 %v1623, %v1742
  %v1784 = vmul.f32 %v1628, %v1742
  %v1785 = vmul.f32 %v1633, %v1742
  %v1786 = vmul.f32 %v1638, %v1742
  %v1787 = vmul.f32 %v1643, %v1742
  %v1788 = vmul.f32 %v1648, %v1742
  %v1789 = vmul.f32 %v1653, %v1742
  %v1790 = vmul.f32 %v1658, %v1742
  %v1791 = vmul.f32 %v1663, %v1742
  %v1792 = vmul.f32 %v1668, %v1742
  %v1793 = vmul.f32 %v1673, %v1742
  %v1794 = vmul.f32 %v1678, %v1742
  %v1795 = vmul.f32 %v1683, %v1742
  %v1796 = vmul.f32 %v1688, %v1742
  %v1797 = vmul.f32 %v1693, %v1742
  %v1798 = vmul.f32 %v1698, %v1742
  %v1799 = vmul.f32 %v1703, %v1742
  %v1800 = vmul.f32 %v1708, %v1742
  %v1801 = vmul.f32 %v1713, %v1742
  %v1802 = vmul.f32 %v1718, %v1742
  %v1803 = vmul.f32 %v1723, %v1742
  %v1804 = vmul.f32 %v1728, %v1742
  %v1805 = vmul.f32 %v1733, %v1742
  %v1806 = vmul.f32 %v1738, %v1742
  %v1807 = vadd.f32 %v236, %v1743
  %v1808 = vadd.f32 %v237, %v1744
  %v1809 = vadd.f32 %v238, %v1745
  %v1810 = vadd.f32 %v239, %v1746
  %v1811 = vadd.f32 %v240, %v1747
  %v1812 = vadd.f32 %v241, %v1748
  %v1813 = vadd.f32 %v242, %v1749
  %v1814 = vadd.f32 %v243, %v1750
  %v1815 = vadd.f32 %v236, %v1751
  %v1816 = vadd.f32 %v237, %v1752
  %v1817 = vadd.f32 %v238, %v1753
  %v1818 = vadd.f32 %v239, %v1754
  %v1819 = vadd.f32 %v240, %v1755
  %v1820 = vadd.f32 %v241, %v1756
  %v1821 = vadd.f32 %v242, %v1757
  %v1822 = vadd.f32 %v243, %v1758
  %v1823 = vadd.f32 %v236, %v1759
  %v1824 = vadd.f32 %v237, %v1760
  %v1825 = vadd.f32 %v238, %v1761
  %v1826 = vadd.f32 %v239, %v1762
  %v1827 = vadd.f32 %v240, %v1763
  %v1828 = vadd.f32 %v241, %v1764
  %v1829 = vadd.f32 %v242, %v1765
  %v1830 = vadd.f32 %v243, %v1766
  %v1831 = vadd.f32 %v236, %v1767
  %v1832 = vadd.f32 %v237, %v1768
  %v1833 = vadd.f32 %v238, %v1769
  %v1834 = vadd.f32 %v239, %v1770
  %v1835 = vadd.f32 %v240, %v1771
  %v1836 = vadd.f32 %v241, %v1772
  %v1837 = vadd.f32 %v242, %v1773
  %v1838 = vadd.f32 %v243, %v1774
  %v1839 = vadd.f32 %v236, %v1775
  %v1840 = vadd.f32 %v237, %v1776
  %v1841 = vadd.f32 %v238, %v1777
  %v1842 = vadd.f32 %v239, %v1778
  %v1843 = vadd.f32 %v240, %v1779
  %v1844 = vadd.f32 %v241, %v1780
  %v1845 = vadd.f32 %v242, %v1781
  %v1846 = vadd.f32 %v243, %v1782
  %v1847 = vadd.f32 %v236, %v1783
  %v1848 = vadd.f32 %v237, %v1784
  %v1849 = vadd.f32 %v238, %v1785
  %v1850 = vadd.f32 %v239, %v1786
  %v1851 = vadd.f32 %v240, %v1787
  %v1852 = vadd.f32 %v241, %v1788
  %v1853 = vadd.f32 %v242, %v1789
  %v1854 = vadd.f32 %v243, %v1790
  %v1855 = vadd.f32 %v236, %v1791
  %v1856 = vadd.f32 %v237, %v1792
  %v1857 = vadd.f32 %v238, %v1793
  %v1858 = vadd.f32 %v239, %v1794
  %v1859 = vadd.f32 %v240, %v1795
  %v1860 = vadd.f32 %v241, %v1796
  %v1861 = vadd.f32 %v242, %v1797
  %v1862 = vadd.f32 %v243, %v1798
  %v1863 = vadd.f32 %v236, %v1799
  %v1864 = vadd.f32 %v237, %v1800
  %v1865 = vadd.f32 %v238, %v1801
  %v1866 = vadd.f32 %v239, %v1802
  %v1867 = vadd.f32 %v240, %v1803
  %v1868 = vadd.f32 %v241, %v1804
  %v1869 = vadd.f32 %v242, %v1805
  %v1870 = vadd.f32 %v243, %v1806
  %1871 = vst [vmem:[%s14] sm:$0xff] %v1807
  %1872 = vst [vmem:[%s14 + $0x8] sm:$0xff] %v1808
  %1873 = vst [vmem:[%s14 + $0x10] sm:$0xff] %v1809
  %1874 = vst [vmem:[%s14 + $0x18] sm:$0xff] %v1810
  %1875 = vst [vmem:[%s14 + $0x20] sm:$0xff] %v1811
  %1876 = vst [vmem:[%s14 + $0x28] sm:$0xff] %v1812
  %1877 = vst [vmem:[%s14 + $0x30] sm:$0xff] %v1813
  %1878 = vst [vmem:[%s14 + $0x38] sm:$0xff] %v1814
  %1879 = vst [vmem:[%s14 + $0x40] sm:$0xff] %v1815
  %1880 = vst [vmem:[%s14 + $0x48] sm:$0xff] %v1816
  %1881 = vst [vmem:[%s14 + $0x50] sm:$0xff] %v1817
  %1882 = vst [vmem:[%s14 + $0x58] sm:$0xff] %v1818
  %1883 = vst [vmem:[%s14 + $0x60] sm:$0xff] %v1819
  %1884 = vst [vmem:[%s14 + $0x68] sm:$0xff] %v1820
  %1885 = vst [vmem:[%s14 + $0x70] sm:$0xff] %v1821
  %1886 = vst [vmem:[%s14 + $0x78] sm:$0xff] %v1822
  %1887 = vst [vmem:[%s14 + $0x80] sm:$0xff] %v1823
  %1888 = vst [vmem:[%s14 + $0x88] sm:$0xff] %v1824
  %1889 = vst [vmem:[%s14 + $0x90] sm:$0xff] %v1825
  %1890 = vst [vmem:[%s14 + $0x98] sm:$0xff] %v1826
  %1891 = vst [vmem:[%s14 + $0xa0] sm:$0xff] %v1827
  %1892 = vst [vmem:[%s14 + $0xa8] sm:$0xff] %v1828
  %1893 = vst [vmem:[%s14 + $0xb0] sm:$0xff] %v1829
  %1894 = vst [vmem:[%s14 + $0xb8] sm:$0xff] %v1830
  %1895 = vst [vmem:[%s14 + $0xc0] sm:$0xff] %v1831
  %1896 = vst [vmem:[%s14 + $0xc8] sm:$0xff] %v1832
  %1897 = vst [vmem:[%s14 + $0xd0] sm:$0xff] %v1833
  %1898 = vst [vmem:[%s14 + $0xd8] sm:$0xff] %v1834
  %1899 = vst [vmem:[%s14 + $0xe0] sm:$0xff] %v1835
  %1900 = vst [vmem:[%s14 + $0xe8] sm:$0xff] %v1836
  %1901 = vst [vmem:[%s14 + $0xf0] sm:$0xff] %v1837
  %1902 = vst [vmem:[%s14 + $0xf8] sm:$0xff] %v1838
  %1903 = vst [vmem:[%s14 + $0x100] sm:$0xff] %v1839
  %1904 = vst [vmem:[%s14 + $0x108] sm:$0xff] %v1840
  %1905 = vst [vmem:[%s14 + $0x110] sm:$0xff] %v1841
  %1906 = vst [vmem:[%s14 + $0x118] sm:$0xff] %v1842
  %1907 = vst [vmem:[%s14 + $0x120] sm:$0xff] %v1843
  %1908 = vst [vmem:[%s14 + $0x128] sm:$0xff] %v1844
  %1909 = vst [vmem:[%s14 + $0x130] sm:$0xff] %v1845
  %1910 = vst [vmem:[%s14 + $0x138] sm:$0xff] %v1846
  %1911 = vst [vmem:[%s14 + $0x140] sm:$0xff] %v1847
  %1912 = vst [vmem:[%s14 + $0x148] sm:$0xff] %v1848
  %1913 = vst [vmem:[%s14 + $0x150] sm:$0xff] %v1849
  %1914 = vst [vmem:[%s14 + $0x158] sm:$0xff] %v1850
  %1915 = vst [vmem:[%s14 + $0x160] sm:$0xff] %v1851
  %1916 = vst [vmem:[%s14 + $0x168] sm:$0xff] %v1852
  %1917 = vst [vmem:[%s14 + $0x170] sm:$0xff] %v1853
  %1918 = vst [vmem:[%s14 + $0x178] sm:$0xff] %v1854
  %1919 = vst [vmem:[%s14 + $0x180] sm:$0xff] %v1855
  %1920 = vst [vmem:[%s14 + $0x188] sm:$0xff] %v1856
  %1921 = vst [vmem:[%s14 + $0x190] sm:$0xff] %v1857
  %1922 = vst [vmem:[%s14 + $0x198] sm:$0xff] %v1858
  %1923 = vst [vmem:[%s14 + $0x1a0] sm:$0xff] %v1859
  %1924 = vst [vmem:[%s14 + $0x1a8] sm:$0xff] %v1860
  %1925 = vst [vmem:[%s14 + $0x1b0] sm:$0xff] %v1861
  %1926 = vst [vmem:[%s14 + $0x1b8] sm:$0xff] %v1862
  %1927 = vst [vmem:[%s14 + $0x1c0] sm:$0xff] %v1863
  %1928 = vst [vmem:[%s14 + $0x1c8] sm:$0xff] %v1864
  %1929 = vst [vmem:[%s14 + $0x1d0] sm:$0xff] %v1865
  %1930 = vst [vmem:[%s14 + $0x1d8] sm:$0xff] %v1866
  %1931 = vst [vmem:[%s14 + $0x1e0] sm:$0xff] %v1867
  %1932 = vst [vmem:[%s14 + $0x1e8] sm:$0xff] %v1868
  %1933 = vst [vmem:[%s14 + $0x1f0] sm:$0xff] %v1869
  %1934 = vst [vmem:[%s14 + $0x1f8] sm:$0xff] %v1870
  // Predicated region
  $region58: #{shape_decoder_forward.1} parent=0 // pred_check
    _
  $region59: #{shape_decoder_forward.1} parent=0 // pred_check_branch
    %1936 = sbr.rel (0) target = $region61
  $region60: #{shape_decoder_forward.1} parent=0 // pred_region
    _
  $region61: #{shape_decoder_forward.1} parent=0 // pred_fallthru
    _
  // Predicated region
  $region62: #{shape_decoder_forward.1} parent=0 // pred_check
    _
  $region63: #{shape_decoder_forward.1} parent=0 // pred_check_branch
    %1938 = sbr.rel (0) target = $region65
  $region64: #{shape_decoder_forward.1} parent=0 // pred_region
    _
  $region65: #{shape_decoder_forward.1} parent=0 // pred_fallthru
    _

</llo_original>
